<compile_context>
chip_gen: v6e
topology: v6e:2x2x1
jax: 0.10.0
libtpu: 0.0.40
codegen_flags: <defaults>
</compile_context>

<pallas_src>
import jax
import jax.numpy as jnp
from jax.experimental import pallas as pl
from jax.experimental.pallas import tpu as pltpu


# ---------------------------------------------------------------------------
# kernel
# ---------------------------------------------------------------------------
def _make_kernel(inv_scale, has_mask, with_attn):
    def kernel(*refs):
        if has_mask:
            q_ref, k_ref, v_ref, m_ref = refs[:4]
            outs = refs[4:]
        else:
            q_ref, k_ref, v_ref = refs[:3]
            m_ref = None
            outs = refs[3:]
        out_ref = outs[0]
        attn_ref = outs[1] if with_attn else None

        q = q_ref[...]
        k = k_ref[...]
        v = v_ref[...]

        # s[n, q, k] = sum_d q[n, q, d] * k[n, k, d]  (MXU, f32 accumulate,
        # no explicit transpose of k); 1/scale applied to the f32 scores.
        s = jnp.einsum("nqd,nkd->nqk", q, k, preferred_element_type=jnp.float32)
        s = s * jnp.float32(inv_scale)

        if m_ref is not None:
            # masked_fill(mask == 0, -1e9); m_ref broadcasts over heads when it
            # is the shared per-batch block of shape (1, Lq, Lk).
            s = jnp.where(m_ref[...] == 0, jnp.float32(-1e9), s)

        # numerically stable softmax over keys (exact division: rows sum to 1)
        s_max = jnp.max(s, axis=-1, keepdims=True)
        e = jnp.exp(s - s_max)
        denom = jnp.sum(e, axis=-1, keepdims=True)
        attn = e / denom

        if attn_ref is not None:
            # lane-dense store: (nb, Lq, Lk) -> (1, nb, Lq*Lk)
            attn_ref[...] = attn.reshape(attn_ref.shape).astype(attn_ref.dtype)

        o = jnp.einsum("nqk,nkd->nqd", attn.astype(v.dtype), v,
                       preferred_element_type=jnp.float32)
        # lane-dense store: (nb, Lq, Dv) -> (1, nb, Lq*Dv)
        out_ref[...] = o.reshape(out_ref.shape).astype(out_ref.dtype)

    return kernel


# ---------------------------------------------------------------------------
# block-size / chip-generation heuristics
# ---------------------------------------------------------------------------
def _chip_config():
    """(per-step VMEM budget bytes, vmem_limit_bytes or None, num tensorcores)."""
    budget, vmem_limit, num_tc = 10 << 20, None, 1
    try:
        kind = jax.devices()[0].device_kind.lower()
    except Exception:
        kind = ""
    if ("v5 lite" in kind) or ("v5e" in kind) or ("v5lite" in kind):
        budget, vmem_limit, num_tc = 20 << 20, 96 << 20, 1   # 128 MiB physical
    elif "v6" in kind:
        budget, vmem_limit, num_tc = 20 << 20, 64 << 20, 1   # 128 MiB physical
    elif "v7" in kind:
        budget, vmem_limit, num_tc = 11 << 20, 48 << 20, 2   # 64 MiB physical
    return budget, vmem_limit, num_tc


def _block_bytes(nb, Lq, Lk, D, Dv, itemsize, mask_bytes, with_attn):
    """Per-grid-step VMEM footprint: double-buffered inputs+outputs plus the
    f32 score/exp/attn/out intermediates."""
    in_b = nb * (Lq * D + Lk * D + Lk * Dv) * itemsize + mask_bytes
    out_b = nb * Lq * Dv * itemsize
    if with_attn:
        out_b += nb * Lq * Lk * itemsize
    interm = nb * (3 * Lq * Lk + 2 * Lq * Dv) * 4
    return 2 * (in_b + out_b) + interm


def _pick_nb(n_group, bytes_fn, budget, num_tc, steps_multiplier=1):
    """Largest divisor of n_group fitting the VMEM budget; prefers >=2 grid
    steps (pipeline overlap) and an even split across TensorCores (v7x)."""
    divs = [d for d in range(1, n_group + 1) if n_group % d == 0]
    fitting = [d for d in divs if bytes_fn(d) <= budget] or [1]
    total = steps_multiplier * n_group

    def steps(d):
        return steps_multiplier * (n_group // d)

    tiers = (
        lambda d: steps(d) >= min(2, total) and steps(d) % max(num_tc, 1) == 0,
        lambda d: steps(d) >= min(2, total),
        lambda d: True,
    )
    for tier in tiers:
        cands = [d for d in fitting if tier(d)]
        if cands:
            return max(cands)
    return 1


# ---------------------------------------------------------------------------
# wrapper
# ---------------------------------------------------------------------------
def scaled_dot_product(q, k, v, mask=None, *, scale, return_attn=True):
    """Pallas implementation of ScaledDotProduct.forward (inference).

    q: [B, H, G, Lq, D], k: [B, H, G, Lk, D], v: [B, H, G, Lk, Dv]
    mask (optional): broadcastable to [B, H, G, Lq, Lk]
    returns (output, attn) if return_attn else output
    """
    B, H, G, Lq, D = q.shape
    Lk = k.shape[3]
    Dv = v.shape[4]
    N = B * H * G
    HG = H * G
    dtype = q.dtype
    itemsize = jnp.dtype(dtype).itemsize
    inv_scale = float(1.0 / float(scale))
    with_attn = bool(return_attn)

    qf = q.reshape(N, Lq, D)
    kf = k.reshape(N, Lk, D)
    vf = v.reshape(N, Lk, Dv)

    budget, vmem_limit, num_tc = _chip_config()

    # ---- mask normalization -------------------------------------------------
    mask_mode = None
    m_arr = None
    Bm = 1
    if mask is not None:
        m = jnp.asarray(mask)
        while m.ndim < 5:
            m = m[None]
        Bm = m.shape[0]
        if m.shape[1] == 1 and m.shape[2] == 1 and Bm in (1, B):
            # common LineTR case: per-batch padding mask -> never blow it up
            # across H*G heads; one (Lq, Lk) block per batch in HBM.
            mask_mode = "batch"
            m_arr = (jnp.broadcast_to(m, (Bm, 1, 1, Lq, Lk)) != 0)
            m_arr = m_arr.astype(jnp.int32).reshape(Bm, Lq, Lk)
        else:
            # mask genuinely varies per head: materialized fallback.
            mask_mode = "full"
            m_arr = (jnp.broadcast_to(m, (B, H, G, Lq, Lk)) != 0)
            m_arr = m_arr.astype(jnp.int32).reshape(N, Lq, Lk)

    # ---- grid / block selection (nb always divides the grouped axis: no pad)
    if mask_mode == "batch":
        mask_bytes_fn = lambda d: Lq * Lk * 4
        bytes_fn = lambda d: _block_bytes(d, Lq, Lk, D, Dv, itemsize,
                                          mask_bytes_fn(d), with_attn)
        nb = _pick_nb(HG, bytes_fn, budget, num_tc, steps_multiplier=B)
        bpb = HG // nb
        NB = N // nb
        grid = (B, bpb)
        dims = ("parallel", "parallel")
        qkv_map = lambda b, j: (b * bpb + j, 0, 0)
        out_map = lambda b, j: (b * bpb + j, 0, 0)
        m_map = (lambda b, j: (0, 0, 0)) if Bm == 1 else (lambda b, j: (b, 0, 0))
        in_specs = [
            pl.BlockSpec((nb, Lq, D), qkv_map),
            pl.BlockSpec((nb, Lk, D), qkv_map),
            pl.BlockSpec((nb, Lk, Dv), qkv_map),
            pl.BlockSpec((1, Lq, Lk), m_map),
        ]
        args = [qf, kf, vf, m_arr]
    else:
        if mask_mode == "full":
            mask_bytes_fn = lambda d: d * Lq * Lk * 4
        else:
            mask_bytes_fn = lambda d: 0
        bytes_fn = lambda d: _block_bytes(d, Lq, Lk, D, Dv, itemsize,
                                          mask_bytes_fn(d), with_attn)
        nb = _pick_nb(N, bytes_fn, budget, num_tc, steps_multiplier=1)
        NB = N // nb
        grid = (NB,)
        dims = ("parallel",)
        qkv_map = lambda i: (i, 0, 0)
        out_map = lambda i: (i, 0, 0)
        in_specs = [
            pl.BlockSpec((nb, Lq, D), qkv_map),
            pl.BlockSpec((nb, Lk, D), qkv_map),
            pl.BlockSpec((nb, Lk, Dv), qkv_map),
        ]
        args = [qf, kf, vf]
        if mask_mode == "full":
            in_specs.append(pl.BlockSpec((nb, Lq, Lk), qkv_map))
            args.append(m_arr)

    # ---- lane-dense output slabs: (NB, nb, Lq*Dv) / (NB, nb, Lq*Lk) ---------
    out_shapes = [jax.ShapeDtypeStruct((NB, nb, Lq * Dv), dtype)]
    out_specs = [pl.BlockSpec((1, nb, Lq * Dv), out_map)]
    if with_attn:
        out_shapes.append(jax.ShapeDtypeStruct((NB, nb, Lq * Lk), dtype))
        out_specs.append(pl.BlockSpec((1, nb, Lq * Lk), out_map))

    bytes_in = (qf.size + kf.size + vf.size) * itemsize
    if m_arr is not None:
        bytes_in += m_arr.size * 4
    bytes_out = N * Lq * Dv * itemsize + (N * Lq * Lk * itemsize if with_attn else 0)
    cost = pl.CostEstimate(
        flops=2 * N * Lq * Lk * (D + Dv),
        transcendentals=N * Lq * Lk,
        bytes_accessed=bytes_in + bytes_out,
    )

    cp_kwargs = dict(dimension_semantics=dims)
    if vmem_limit is not None:
        cp_kwargs["vmem_limit_bytes"] = int(vmem_limit)

    results = pl.pallas_call(
        _make_kernel(inv_scale, mask_mode is not None, with_attn),
        out_shape=tuple(out_shapes),
        grid=grid,
        in_specs=in_specs,
        out_specs=tuple(out_specs),
        compiler_params=pltpu.CompilerParams(**cp_kwargs),
        cost_estimate=cost,
    )(*args)

    out = results[0].reshape(B, H, G, Lq, Dv)          # free contiguous reshape
    if with_attn:
        attn = results[1].reshape(B, H, G, Lq, Lk)     # free contiguous reshape
        return out, attn
    return out


# ---------------------------------------------------------------------------
# plain-JAX reference (mirrors the PyTorch forward in eval mode)
# ---------------------------------------------------------------------------
def _reference(q, k, v, mask, scale):
    attn = jnp.einsum("bhgqd,bhgkd->bhgqk", q / scale, k)
    if mask is not None:
        m = jnp.asarray(mask)
        while m.ndim < 5:
            m = m[None]
        attn = jnp.where(m == 0, -1e9, attn)
    attn = jax.nn.softmax(attn, axis=-1)
    out = jnp.einsum("bhgqk,bhgkd->bhgqd", attn, v)
    return out, attn


if __name__ == "__main__":
    key = jax.random.PRNGKey(0)
    kq, kk, kv, km1, km2 = jax.random.split(key, 5)

    B, H, G, L, D = 2, 2, 2, 16, 32
    scale = float(D) ** 0.5

    q = jax.random.normal(kq, (B, H, G, L, D), dtype=jnp.float32)
    k = jax.random.normal(kk, (B, H, G, L, D), dtype=jnp.float32)
    v = jax.random.normal(kv, (B, H, G, L, D), dtype=jnp.float32)

    # 1) unmasked path
    out, attn = scaled_dot_product(q, k, v, mask=None, scale=scale)
    jax.block_until_ready((out, attn))
    out_ref, attn_ref = _reference(q, k, v, None, scale)
    assert out.shape == out_ref.shape and attn.shape == attn_ref.shape
    assert jnp.allclose(out, out_ref, atol=1e-3, rtol=1e-3)
    assert jnp.allclose(attn, attn_ref, atol=1e-3, rtol=1e-3)

    # 2) per-batch padding mask ([B,1,1,L,L]) -> non-materialized mask path
    mask_b = (jax.random.uniform(km1, (B, 1, 1, L, L)) > 0.3).astype(jnp.float32)
    out_m, attn_m = scaled_dot_product(q, k, v, mask=mask_b, scale=scale)
    jax.block_until_ready((out_m, attn_m))
    out_mr, attn_mr = _reference(q, k, v, mask_b, scale)
    assert jnp.allclose(out_m, out_mr, atol=1e-3, rtol=1e-3)
    assert jnp.allclose(attn_m, attn_mr, atol=1e-3, rtol=1e-3)

    # 3) per-head mask ([B,H,G,L,L]) -> materialized fallback path
    mask_f = (jax.random.uniform(km2, (B, H, G, L, L)) > 0.3).astype(jnp.float32)
    out_f, attn_f = scaled_dot_product(q, k, v, mask=mask_f, scale=scale)
    jax.block_until_ready((out_f, attn_f))
    out_fr, attn_fr = _reference(q, k, v, mask_f, scale)
    assert jnp.allclose(out_f, out_fr, atol=1e-3, rtol=1e-3)
    assert jnp.allclose(attn_f, attn_fr, atol=1e-3, rtol=1e-3)

    # 4) attn-skipping path (halves HBM writeback when attn is unused)
    out_only = scaled_dot_product(q, k, v, mask=None, scale=scale,
                                  return_attn=False)
    jax.block_until_ready(out_only)
    assert jnp.allclose(out_only, out_ref, atol=1e-3, rtol=1e-3)

    # 5) bf16 path: operands hit the MXU in bf16, outputs come back in bf16
    qb, kb, vb = (x.astype(jnp.bfloat16) for x in (q, k, v))
    out_b, attn_b = scaled_dot_product(qb, kb, vb, mask=None, scale=scale)
    jax.block_until_ready((out_b, attn_b))
    assert out_b.dtype == jnp.bfloat16 and attn_b.dtype == jnp.bfloat16
    assert bool(jnp.isfinite(out_b.astype(jnp.float32)).all())
    assert jnp.allclose(out_b.astype(jnp.float32), out_ref, atol=5e-2, rtol=5e-2)

    print("KERNEL_OK")
</pallas_src>

<mosaic_0001>
module attributes {stable_mosaic.version = 11 : i64} {
  func.func @kernel(%arg0: i32, %arg1: memref<4x16x32xf32, #tpu.memory_space<vmem>>, %arg2: memref<4x16x32xf32, #tpu.memory_space<vmem>>, %arg3: memref<4x16x32xf32, #tpu.memory_space<vmem>>, %arg4: memref<1x4x512xf32, #tpu.memory_space<vmem>>, %arg5: memref<1x4x256xf32, #tpu.memory_space<vmem>>) attributes {dimension_semantics = [#tpu.dimension_semantics<parallel>], iteration_bounds = array<i64: 2>, scalar_prefetch = 0 : i64, scratch_operands = 0 : i64, tpu.core_type = #tpu.core_type<tc>, window_params = [{transform_indices = @transform_0, window_bounds = array<i64: 4, 16, 32>}, {transform_indices = @transform_1, window_bounds = array<i64: 4, 16, 32>}, {transform_indices = @transform_2, window_bounds = array<i64: 4, 16, 32>}, {transform_indices = @transform_3, window_bounds = array<i64: 1, 4, 512>}, {transform_indices = @transform_4, window_bounds = array<i64: 1, 4, 256>}]} {
    %c0 = arith.constant 0 : index
    %c0_0 = arith.constant 0 : index
    %c0_1 = arith.constant 0 : index
    %0 = vector.load %arg1[%c0, %c0_0, %c0_1] : memref<4x16x32xf32, #tpu.memory_space<vmem>>, vector<4x16x32xf32>
    %c0_2 = arith.constant 0 : index
    %c0_3 = arith.constant 0 : index
    %c0_4 = arith.constant 0 : index
    %1 = vector.load %arg2[%c0_2, %c0_3, %c0_4] : memref<4x16x32xf32, #tpu.memory_space<vmem>>, vector<4x16x32xf32>
    %c0_5 = arith.constant 0 : index
    %c0_6 = arith.constant 0 : index
    %c0_7 = arith.constant 0 : index
    %2 = vector.load %arg3[%c0_5, %c0_6, %c0_7] : memref<4x16x32xf32, #tpu.memory_space<vmem>>, vector<4x16x32xf32>
    "tpu.trace_start"() <{level = 10 : i32, message = "nqd,nkd->nqk"}> : () -> ()
    %cst = arith.constant dense<0.000000e+00> : vector<4x16x16xf32>
    %3 = tpu.matmul %0, %1, %cst {dimension_numbers = #tpu.dot_dimension_numbers<[2], [2], [1], [1], [0, 0, 0, 1, 1, 1], [0], [0]>} : vector<4x16x32xf32>, vector<4x16x32xf32>, vector<4x16x16xf32> -> vector<4x16x16xf32>
    "tpu.trace_stop"() : () -> ()
    %cst_8 = arith.constant 0.176776692 : f32
    %4 = vector.broadcast %cst_8 : f32 to vector<4x16x16xf32>
    %5 = arith.mulf %3, %4 : vector<4x16x16xf32>
    %cst_9 = arith.constant dense<0xFF800000> : vector<4x16xf32>
    %6 = vector.multi_reduction <maximumf>, %5, %cst_9 [2] : vector<4x16x16xf32> to vector<4x16xf32>
    %7 = vector.shape_cast %6 : vector<4x16xf32> to vector<4x16x1xf32>
    %8 = vector.broadcast %7 : vector<4x16x1xf32> to vector<4x16x16xf32>
    %9 = arith.subf %5, %8 : vector<4x16x16xf32>
    %10 = math.exp %9 : vector<4x16x16xf32>
    %cst_10 = arith.constant dense<0.000000e+00> : vector<4x16xf32>
    %11 = vector.multi_reduction <add>, %10, %cst_10 [2] : vector<4x16x16xf32> to vector<4x16xf32>
    %12 = vector.shape_cast %11 : vector<4x16xf32> to vector<4x16x1xf32>
    %13 = vector.broadcast %12 : vector<4x16x1xf32> to vector<4x16x16xf32>
    %14 = arith.divf %10, %13 : vector<4x16x16xf32>
    %15 = vector.shape_cast %14 : vector<4x16x16xf32> to vector<1x4x256xf32>
    %c0_11 = arith.constant 0 : index
    %c0_12 = arith.constant 0 : index
    %c0_13 = arith.constant 0 : index
    %16 = vector.load %arg5[%c0_11, %c0_12, %c0_13] : memref<1x4x256xf32, #tpu.memory_space<vmem>>, vector<1x4x256xf32>
    tpu.vector_store %arg5[%c0_11, %c0_12, %c0_13], %15 {strides = array<i32>} : memref<1x4x256xf32, #tpu.memory_space<vmem>>, vector<1x4x256xf32>,
    "tpu.trace_start"() <{level = 10 : i32, message = "nqk,nkd->nqd"}> : () -> ()
    %cst_14 = arith.constant dense<0.000000e+00> : vector<4x16x32xf32>
    %17 = tpu.matmul %14, %2, %cst_14 {dimension_numbers = #tpu.dot_dimension_numbers<[2], [1], [1], [2], [0, 0, 0, 1, 1, 2], [0], [0]>} : vector<4x16x16xf32>, vector<4x16x32xf32>, vector<4x16x32xf32> -> vector<4x16x32xf32>
    "tpu.trace_stop"() : () -> ()
    %18 = vector.shape_cast %17 : vector<4x16x32xf32> to vector<1x4x512xf32>
    %c0_15 = arith.constant 0 : index
    %c0_16 = arith.constant 0 : index
    %c0_17 = arith.constant 0 : index
    %19 = vector.load %arg4[%c0_15, %c0_16, %c0_17] : memref<1x4x512xf32, #tpu.memory_space<vmem>>, vector<1x4x512xf32>
    tpu.vector_store %arg4[%c0_15, %c0_16, %c0_17], %18 {strides = array<i32>} : memref<1x4x512xf32, #tpu.memory_space<vmem>>, vector<1x4x512xf32>,
    return
  }
  func.func @transform_0(%arg0: i32) -> (i32, i32, i32) {
    %c0_i32 = arith.constant 0 : i32
    %c0_i32_0 = arith.constant 0 : i32
    %c0_i32_1 = arith.constant 0 : i32
    return %arg0, %c0_i32, %c0_i32_0 : i32, i32, i32
  }
  func.func @transform_1(%arg0: i32) -> (i32, i32, i32) {
    %c0_i32 = arith.constant 0 : i32
    %c0_i32_0 = arith.constant 0 : i32
    %c0_i32_1 = arith.constant 0 : i32
    return %arg0, %c0_i32, %c0_i32_0 : i32, i32, i32
  }
  func.func @transform_2(%arg0: i32) -> (i32, i32, i32) {
    %c0_i32 = arith.constant 0 : i32
    %c0_i32_0 = arith.constant 0 : i32
    %c0_i32_1 = arith.constant 0 : i32
    return %arg0, %c0_i32, %c0_i32_0 : i32, i32, i32
  }
  func.func @transform_3(%arg0: i32) -> (i32, i32, i32) {
    %c0_i32 = arith.constant 0 : i32
    %c0_i32_0 = arith.constant 0 : i32
    %c0_i32_1 = arith.constant 0 : i32
    return %arg0, %c0_i32, %c0_i32_0 : i32, i32, i32
  }
  func.func @transform_4(%arg0: i32) -> (i32, i32, i32) {
    %c0_i32 = arith.constant 0 : i32
    %c0_i32_0 = arith.constant 0 : i32
    %c0_i32_1 = arith.constant 0 : i32
    return %arg0, %c0_i32, %c0_i32_0 : i32, i32, i32
  }
}

</mosaic_0001>

<llo_original>
// kernel: tpu_custom_call.1
$region0: #{tpu_custom_call.1}
  #allocation0 [shape = 'u32[]', space=smem, size = 0x4, offset = 0x4, fixed_abs, tag = 'smem constant byte address 0x4 - core index']
  #allocation1 [shape = 'u32[144,128]{1,0:T(1,128)}', space=vmem, size = 0x12000, scoped, tag = 'internal scratch']
  %s0 = inlined_call_operand.hbm [shape: f32[8,16,32], index: 0, kind: input, shape index: {}]
  %s1 = inlined_call_operand.hbm [shape: f32[8,16,32], index: 1, kind: input, shape index: {}]
  %s2 = inlined_call_operand.hbm [shape: f32[8,16,32], index: 2, kind: input, shape index: {}]
  %s3 = inlined_call_operand.hbm [shape: f32[2,4,512], index: 3, kind: output, shape index: {0}]
  %s4 = inlined_call_operand.hbm [shape: f32[2,4,256], index: 4, kind: output, shape index: {1}]
  %5 = xla_tuple %s3, %s4
  %s6 = sld [smem:[#allocation0]]
  $region65: #{tpu_custom_call.1} parent=0
    _
  %s8 = ssub.s32 1, %s6
  %s9 = scalar_select 0, %s8, %s6
  $region1: #{tpu_custom_call.1} parent=0
    #allocation2 [shape = 'u8[65536]{0}', space=vmem, size = 0x10000, scoped, tag = 'input window, operand 0']
    #allocation3 [shape = 's32[2]{0}', space=sflag, size = 0x8, scoped, tag = 'scoped memory for tpu_custom_call.1']
    #allocation4 [shape = 's32[2]{0}', space=sflag, size = 0x8, scoped, tag = 'scoped memory for tpu_custom_call.1']
    #allocation5 [shape = 'u8[65536]{0}', space=vmem, size = 0x10000, scoped, tag = 'input window, operand 1']
    #allocation6 [shape = 's32[2]{0}', space=sflag, size = 0x8, scoped, tag = 'scoped memory for tpu_custom_call.1']
    #allocation7 [shape = 'u8[65536]{0}', space=vmem, size = 0x10000, scoped, tag = 'input window, operand 2']
    #allocation8 [shape = 'u8[16384]{0}', space=vmem, size = 0x4000, scoped, tag = 'output window, operand 0']
    #allocation9 [shape = 'u8[8192]{0}', space=vmem, size = 0x2000, scoped, tag = 'output window, operand 1']
    #allocation10 [shape = 's32[2]{0}', space=sflag, size = 0x8, scoped, tag = 'scoped memory for tpu_custom_call.1']
    %10 = vsyncpa [#allocation3], 0
    %s11 = scalar_lea.sflag [#allocation3], 1
    %12 = vsyncpa %s11, 0
    %13 = vsyncpa [#allocation6], 0
    %s14 = scalar_lea.sflag [#allocation6], 1
    %15 = vsyncpa %s14, 0
    %16 = vsyncpa [#allocation4], 0
    %s17 = scalar_lea.sflag [#allocation4], 1
    %18 = vsyncpa %s17, 0
    %19 = vsyncpa [#allocation10], 0
    %s20 = scalar_lea.sflag [#allocation10], 1
    %21 = vsyncpa %s20, 0
    loop: start=0, step=1, limit=4
    $region2: #{tpu_custom_call.1} parent=1 // loop_pre_header
      _
    $region3: #{tpu_custom_call.1} parent=1 // loop_header
      %s23 = sphi 0, %s27
      %p24 = scmp.ge.s32.totalorder %s23, 4
      %s33 = sphi 0, %s35
      %s36 = sphi 0, %s33
      %s37 = sphi 0, %s36
      %s53 = sphi 0, %s37
      %s59 = sphi 0, %s61
      %s62 = sphi 0, %s59
      %s63 = sphi 0, %s62
      %s79 = sphi 0, %s63
      %s85 = sphi 0, %s87
      %s88 = sphi 0, %s85
      %s89 = sphi 0, %s88
      %s105 = sphi 0, %s89
      %s111 = sphi 0, %s113
      %s114 = sphi 0, %s111
      %s115 = sphi 0, %s114
      %s131 = sphi 0, %s115
      %s137 = sphi 0, %s139
      %s140 = sphi 0, %s137
      %s141 = sphi 0, %s140
      %s157 = sphi 0, %s141
    $region4: #{tpu_custom_call.1} parent=1 // loop_header_branch
      %26 = sbr.rel (%p24) target = $region8
    $region5: #{tpu_custom_call.1} parent=1 // loop_body
      %s28 = ssub.s32 %s23, 1
      %s29 = ssub.s32 %s23, 2
      %s30 = sadd.s32 %s23, 1
      %s31 = ssub.s32 %s23, %s30
      %p32 = scmp.eq.s32.totalorder %s31, 0
      %s34 = sadd.s32 %s33, 1
      %s35 = scalar_select %p32, %s33, %s34
      %p38 = pneg %p32
      %p39 = scmp.eq.s32.totalorder %s23, 1
      %p40 = por %p38, %p39
      %p41 = scmp.ne.s32.totalorder %s33, %s36
      %p42 = scmp.eq.s32.totalorder %s23, 0
      %p43 = por %p41, %p42
      %p44 = scmp.ne.s32.totalorder %s33, %s36
      %p45 = scmp.eq.s32.totalorder %s28, 1
      %p46 = por %p44, %p45
      %p47 = scmp.ne.s32.totalorder %s36, %s37
      %p48 = scmp.eq.s32.totalorder %s28, 0
      %p49 = por %p47, %p48
      %p50 = scmp.ne.s32.totalorder %s36, %s37
      %p51 = scmp.eq.s32.totalorder %s29, 1
      %p52 = por %p50, %p51
      %p54 = scmp.ne.s32.totalorder %s37, %s53
      %p55 = scmp.eq.s32.totalorder %s29, 0
      %p56 = por %p54, %p55
      %s57 = ssub.s32 %s23, %s30
      %p58 = scmp.eq.s32.totalorder %s57, 0
      %s60 = sadd.s32 %s59, 1
      %s61 = scalar_select %p58, %s59, %s60
      %p64 = pneg %p58
      %p65 = scmp.eq.s32.totalorder %s23, 1
      %p66 = por %p64, %p65
      %p67 = scmp.ne.s32.totalorder %s59, %s62
      %p68 = scmp.eq.s32.totalorder %s23, 0
      %p69 = por %p67, %p68
      %p70 = scmp.ne.s32.totalorder %s59, %s62
      %p71 = scmp.eq.s32.totalorder %s28, 1
      %p72 = por %p70, %p71
      %p73 = scmp.ne.s32.totalorder %s62, %s63
      %p74 = scmp.eq.s32.totalorder %s28, 0
      %p75 = por %p73, %p74
      %p76 = scmp.ne.s32.totalorder %s62, %s63
      %p77 = scmp.eq.s32.totalorder %s29, 1
      %p78 = por %p76, %p77
      %p80 = scmp.ne.s32.totalorder %s63, %s79
      %p81 = scmp.eq.s32.totalorder %s29, 0
      %p82 = por %p80, %p81
      %s83 = ssub.s32 %s23, %s30
      %p84 = scmp.eq.s32.totalorder %s83, 0
      %s86 = sadd.s32 %s85, 1
      %s87 = scalar_select %p84, %s85, %s86
      %p90 = pneg %p84
      %p91 = scmp.eq.s32.totalorder %s23, 1
      %p92 = por %p90, %p91
      %p93 = scmp.ne.s32.totalorder %s85, %s88
      %p94 = scmp.eq.s32.totalorder %s23, 0
      %p95 = por %p93, %p94
      %p96 = scmp.ne.s32.totalorder %s85, %s88
      %p97 = scmp.eq.s32.totalorder %s28, 1
      %p98 = por %p96, %p97
      %p99 = scmp.ne.s32.totalorder %s88, %s89
      %p100 = scmp.eq.s32.totalorder %s28, 0
      %p101 = por %p99, %p100
      %p102 = scmp.ne.s32.totalorder %s88, %s89
      %p103 = scmp.eq.s32.totalorder %s29, 1
      %p104 = por %p102, %p103
      %p106 = scmp.ne.s32.totalorder %s89, %s105
      %p107 = scmp.eq.s32.totalorder %s29, 0
      %p108 = por %p106, %p107
      %s109 = ssub.s32 %s23, %s30
      %p110 = scmp.eq.s32.totalorder %s109, 0
      %s112 = sadd.s32 %s111, 1
      %s113 = scalar_select %p110, %s111, %s112
      %p116 = pneg %p110
      %p117 = scmp.eq.s32.totalorder %s23, 1
      %p118 = por %p116, %p117
      %p119 = scmp.ne.s32.totalorder %s111, %s114
      %p120 = scmp.eq.s32.totalorder %s23, 0
      %p121 = por %p119, %p120
      %p122 = scmp.ne.s32.totalorder %s111, %s114
      %p123 = scmp.eq.s32.totalorder %s28, 1
      %p124 = por %p122, %p123
      %p125 = scmp.ne.s32.totalorder %s114, %s115
      %p126 = scmp.eq.s32.totalorder %s28, 0
      %p127 = por %p125, %p126
      %p128 = scmp.ne.s32.totalorder %s114, %s115
      %p129 = scmp.eq.s32.totalorder %s29, 1
      %p130 = por %p128, %p129
      %p132 = scmp.ne.s32.totalorder %s115, %s131
      %p133 = scmp.eq.s32.totalorder %s29, 0
      %p134 = por %p132, %p133
      %s135 = ssub.s32 %s23, %s30
      %p136 = scmp.eq.s32.totalorder %s135, 0
      %s138 = sadd.s32 %s137, 1
      %s139 = scalar_select %p136, %s137, %s138
      %p142 = pneg %p136
      %p143 = scmp.eq.s32.totalorder %s23, 1
      %p144 = por %p142, %p143
      %p145 = scmp.ne.s32.totalorder %s137, %s140
      %p146 = scmp.eq.s32.totalorder %s23, 0
      %p147 = por %p145, %p146
      %p148 = scmp.ne.s32.totalorder %s137, %s140
      %p149 = scmp.eq.s32.totalorder %s28, 1
      %p150 = por %p148, %p149
      %p151 = scmp.ne.s32.totalorder %s140, %s141
      %p152 = scmp.eq.s32.totalorder %s28, 0
      %p153 = por %p151, %p152
      %p154 = scmp.ne.s32.totalorder %s140, %s141
      %p155 = scmp.eq.s32.totalorder %s29, 1
      %p156 = por %p154, %p155
      %p158 = scmp.ne.s32.totalorder %s141, %s157
      %p159 = scmp.eq.s32.totalorder %s29, 0
      %p160 = por %p158, %p159
      %p161 = scmp.le.s32.totalorder 1, %s23
      %p162 = scmp.lt.s32.totalorder %s23, 3
      %p163 = pnand %p161, %p162
      %p164 = pneg %p163
      // Predicated region
      $region9: #{tpu_custom_call.1} parent=5 // pred_check
        _
      $region10: #{tpu_custom_call.1} parent=5 // pred_check_branch
        %166 = sbr.rel (%p163) target = $region12
      $region11: #{tpu_custom_call.1} parent=5 // pred_region
        %s167 = ssub.s32 %s23, 1
      $region12: #{tpu_custom_call.1} parent=5 // pred_fallthru
        _
      %p168 = scmp.lt.s32.totalorder %s23, 2
      // Predicated region
      $region13: #{tpu_custom_call.1} parent=5 // pred_check
        %p169 = pneg %p168
      $region14: #{tpu_custom_call.1} parent=5 // pred_check_branch
        %171 = sbr.rel (%p169) target = $region16
      $region15: #{tpu_custom_call.1} parent=5 // pred_region
        // Predicated region
        $region17: #{tpu_custom_call.1} parent=15 // pred_check
          %p172 = pneg %p43
        $region18: #{tpu_custom_call.1} parent=15 // pred_check_branch
          %174 = sbr.rel (%p172) target = $region20
        $region19: #{tpu_custom_call.1} parent=15 // pred_region
          %s175 = sand.u32 %s33, 1
          %s176 = scalar_lea.sflag [#allocation3], %s175
          %s177 = sand.u32 %s33, 1
          %s178 = smul.addr %s177, 64
          %s179 = scalar_lea.vmem [#allocation2], %s178
          %s180 = smul.u32 4, %s23
          %s182 = ssub.s32 1024, 1024
          %183 = vsyncadd %s176, %s182
          %s184 = smul.addr %s180, 2
          %s185 = smul.addr %s184, 128
          %s186 = scalar_lea.hbm %s0, %s185
          %s187 = sshll.u32 %s179, 4
          %s188 = int_to_ptr.vmem [resolvable:$true] %s187
          %193 = dma.hbm_to_vmem [thread:$0]  %s186, 1024, %s188, %s176, 128, 128, 8
        $region20: #{tpu_custom_call.1} parent=15 // pred_fallthru
          _
        // Predicated region
        $region21: #{tpu_custom_call.1} parent=15 // pred_check
          %p194 = pneg %p69
        $region22: #{tpu_custom_call.1} parent=15 // pred_check_branch
          %196 = sbr.rel (%p194) target = $region24
        $region23: #{tpu_custom_call.1} parent=15 // pred_region
          %s197 = sand.u32 %s23, 1
          %s198 = scalar_lea.sflag [#allocation6], %s197
          %s199 = sand.u32 %s59, 1
          %s200 = smul.addr %s199, 64
          %s201 = scalar_lea.vmem [#allocation5], %s200
          %s202 = smul.u32 4, %s23
          %s204 = ssub.s32 1024, 1024
          %205 = vsyncadd %s198, %s204
          %s206 = smul.addr %s202, 2
          %s207 = smul.addr %s206, 128
          %s208 = scalar_lea.hbm %s1, %s207
          %s209 = sshll.u32 %s201, 4
          %s210 = int_to_ptr.vmem [resolvable:$true] %s209
          %215 = dma.hbm_to_vmem [thread:$0]  %s208, 1024, %s210, %s198, 128, 128, 8
        $region24: #{tpu_custom_call.1} parent=15 // pred_fallthru
          _
        // Predicated region
        $region25: #{tpu_custom_call.1} parent=15 // pred_check
          %p216 = pneg %p95
        $region26: #{tpu_custom_call.1} parent=15 // pred_check_branch
          %218 = sbr.rel (%p216) target = $region28
        $region27: #{tpu_custom_call.1} parent=15 // pred_region
          %s219 = sand.u32 %s23, 1
          %s220 = scalar_lea.sflag [#allocation6], %s219
          %s221 = sand.u32 %s85, 1
          %s222 = smul.addr %s221, 64
          %s223 = scalar_lea.vmem [#allocation7], %s222
          %s224 = smul.u32 4, %s23
          %s226 = ssub.s32 1024, 1024
          %227 = vsyncadd %s220, %s226
          %s228 = smul.addr %s224, 2
          %s229 = smul.addr %s228, 128
          %s230 = scalar_lea.hbm %s2, %s229
          %s231 = sshll.u32 %s223, 4
          %s232 = int_to_ptr.vmem [resolvable:$true] %s231
          %237 = dma.hbm_to_vmem [thread:$0]  %s230, 1024, %s232, %s220, 128, 128, 8
        $region28: #{tpu_custom_call.1} parent=15 // pred_fallthru
          _
      $region16: #{tpu_custom_call.1} parent=5 // pred_fallthru
        _
      %p238 = scmp.le.s32.totalorder 1, %s23
      %p239 = scmp.lt.s32.totalorder %s23, 3
      %p240 = pnand %p238, %p239
      %p241 = pneg %p240
      // Predicated region
      $region29: #{tpu_custom_call.1} parent=5 // pred_check
        _
      $region30: #{tpu_custom_call.1} parent=5 // pred_check_branch
        %243 = sbr.rel (%p240) target = $region32
      $region31: #{tpu_custom_call.1} parent=5 // pred_region
        %s244 = ssub.s32 %s23, 1
        %s245 = sand.u32 %s36, 1
        %s246 = scalar_lea.sflag [#allocation3], %s245
        %s247 = sand.u32 %s36, 1
        %s248 = smul.addr %s247, 64
        %s249 = scalar_lea.vmem [#allocation2], %s248
        // Predicated region
        $region33: #{tpu_custom_call.1} parent=31 // pred_check
          %p250 = pneg %p49
        $region34: #{tpu_custom_call.1} parent=31 // pred_check_branch
          %252 = sbr.rel (%p250) target = $region36
        $region35: #{tpu_custom_call.1} parent=31 // pred_region
          %253 = dma.done %s246, 1024
        $region36: #{tpu_custom_call.1} parent=31 // pred_fallthru
          _
        %s254 = sand.u32 %s28, 1
        %s255 = scalar_lea.sflag [#allocation6], %s254
        %s256 = sand.u32 %s62, 1
        %s257 = smul.addr %s256, 64
        %s258 = scalar_lea.vmem [#allocation5], %s257
        // Predicated region
        $region37: #{tpu_custom_call.1} parent=31 // pred_check
          %p259 = pneg %p75
        $region38: #{tpu_custom_call.1} parent=31 // pred_check_branch
          %261 = sbr.rel (%p259) target = $region40
        $region39: #{tpu_custom_call.1} parent=31 // pred_region
          %262 = dma.done %s255, 1024
        $region40: #{tpu_custom_call.1} parent=31 // pred_fallthru
          _
        %s263 = sand.u32 %s28, 1
        %s264 = scalar_lea.sflag [#allocation6], %s263
        %s265 = sand.u32 %s88, 1
        %s266 = smul.addr %s265, 64
        %s267 = scalar_lea.vmem [#allocation7], %s266
        // Predicated region
        $region41: #{tpu_custom_call.1} parent=31 // pred_check
          %p268 = pneg %p101
        $region42: #{tpu_custom_call.1} parent=31 // pred_check_branch
          %270 = sbr.rel (%p268) target = $region44
        $region43: #{tpu_custom_call.1} parent=31 // pred_region
          %271 = dma.done %s264, 1024
        $region44: #{tpu_custom_call.1} parent=31 // pred_fallthru
          _
        %s272 = sand.u32 %s36, 1
        %s273 = scalar_lea.sflag [#allocation3], %s272
        %s274 = sand.u32 %s36, 1
        %s275 = smul.addr %s274, 64
        %s276 = scalar_lea.vmem [#allocation2], %s275
        %p277 = pneg %p49
        %p278 = pneg %p46
        %s279 = sand.u32 %s28, 1
        %s280 = scalar_lea.sflag [#allocation6], %s279
        %s281 = sand.u32 %s62, 1
        %s282 = smul.addr %s281, 64
        %s283 = scalar_lea.vmem [#allocation5], %s282
        %p284 = pneg %p75
        %p285 = pneg %p72
        %s286 = sand.u32 %s28, 1
        %s287 = scalar_lea.sflag [#allocation6], %s286
        %s288 = sand.u32 %s88, 1
        %s289 = smul.addr %s288, 64
        %s290 = scalar_lea.vmem [#allocation7], %s289
        %p291 = pneg %p101
        %p292 = pneg %p98
        %p293 = pneg %p127
        %p294 = pneg %p124
        %s295 = sand.u32 %s114, 1
        %s296 = scalar_lea.sflag [#allocation4], %s295
        %s297 = sand.u32 %s114, 1
        %s298 = smul.addr %s297, 16
        %s299 = scalar_lea.vmem [#allocation8], %s298
        %p300 = pneg %p153
        %p301 = pneg %p150
        %s302 = sand.u32 %s140, 1
        %s303 = scalar_lea.sflag [#allocation10], %s302
        %s304 = sand.u32 %s140, 1
        %s305 = smul.addr %s304, 8
        %s306 = scalar_lea.vmem [#allocation9], %s305
        %s307 = smul.u32 4, %s28
        %s308 = smul.u32 4, %s28
        %s309 = smul.u32 4, %s28
        %v310 = vld [vmem:[%s249] sm:$0xff]
        %v311 = vld [vmem:[%s249 + $0x8] sm:$0xff]
        %v312 = vld [vmem:[%s249 + $0x10] sm:$0xff]
        %v313 = vld [vmem:[%s249 + $0x18] sm:$0xff]
        %v314 = vld [vmem:[%s249 + $0x20] sm:$0xff]
        %v315 = vld [vmem:[%s249 + $0x28] sm:$0xff]
        %v316 = vld [vmem:[%s249 + $0x30] sm:$0xff]
        %v317 = vld [vmem:[%s249 + $0x38] sm:$0xff]
        %v318 = vld [vmem:[%s258] sm:$0xff]
        %v319 = vld [vmem:[%s258 + $0x8] sm:$0xff]
        %v320 = vld [vmem:[%s258 + $0x10] sm:$0xff]
        %v321 = vld [vmem:[%s258 + $0x18] sm:$0xff]
        %v322 = vld [vmem:[%s258 + $0x20] sm:$0xff]
        %v323 = vld [vmem:[%s258 + $0x28] sm:$0xff]
        %v324 = vld [vmem:[%s258 + $0x30] sm:$0xff]
        %v325 = vld [vmem:[%s258 + $0x38] sm:$0xff]
        %v326 = vld [vmem:[%s267] sm:$0xff]
        %v327 = vld [vmem:[%s267 + $0x8] sm:$0xff]
        %v328 = vld [vmem:[%s267 + $0x10] sm:$0xff]
        %v329 = vld [vmem:[%s267 + $0x18] sm:$0xff]
        %v330 = vld [vmem:[%s267 + $0x20] sm:$0xff]
        %v331 = vld [vmem:[%s267 + $0x28] sm:$0xff]
        %v332 = vld [vmem:[%s267 + $0x30] sm:$0xff]
        %v333 = vld [vmem:[%s267 + $0x38] sm:$0xff]
        %vm334 = vcmask 261120
        %v336 = vsel %vm334, %v310, 0
        %v339 = vsel %vm334, %v311, 0
        %v342 = vsel %vm334, %v318, 0
        %v345 = vsel %vm334, %v319, 0
        %347 = vmatprep.subr.mxu0 0.0
        %348 = vmatpush1.xpose.msra.mxu0 0.0
        %349 = vmatprep.subr.mxu0 0.0
        %350 = vmatpush1.xpose.msra.mxu0 0.0
        %351 = vmatprep.subr.mxu0 0.0
        %352 = vmatpush1.xpose.msra.mxu0 0.0
        %353 = vmatprep.subr.mxu0 0.0
        %354 = vmatpush1.xpose.msra.mxu0 0.0
        %355 = vmatprep.subr.mxu0 0.0
        %356 = vmatpush1.xpose.msra.mxu0 0.0
        %357 = vmatprep.subr.mxu0 0.0
        %358 = vmatpush1.xpose.msra.mxu0 0.0
        %359 = vmatprep.subr.mxu0 0.0
        %360 = vmatpush1.xpose.msra.mxu0 0.0
        %361 = vmatprep.subr.mxu0 0.0
        %362 = vmatpush1.xpose.msra.mxu0 0.0
        %363 = vmatprep.subr.mxu0 0.0
        %364 = vmatpush1.xpose.msra.mxu0 0.0
        %365 = vmatprep.subr.mxu0 0.0
        %366 = vmatpush1.xpose.msra.mxu0 0.0
        %367 = vmatprep.subr.mxu0 0.0
        %368 = vmatpush1.xpose.msra.mxu0 0.0
        %369 = vmatprep.subr.mxu0 0.0
        %370 = vmatpush1.xpose.msra.mxu0 0.0
        %371 = vmatprep.subr.mxu0 0.0
        %372 = vmatpush1.xpose.msra.mxu0 0.0
        %373 = vmatprep.subr.mxu0 0.0
        %374 = vmatpush1.xpose.msra.mxu0 0.0
        %375 = vmatprep.subr.mxu0 0.0
        %376 = vmatpush1.xpose.msra.mxu0 %v345
        %377 = vmatprep.subr.mxu0 0.0
        %378 = vmatpush1.xpose.msra.mxu0 %v342
        %379 = vmatprep.subr.mxu0 0.0
        %380 = vmatpush2.xpose.msra.mxu0 0.0
        %381 = vmatprep.subr.mxu0 0.0
        %382 = vmatpush2.xpose.msra.mxu0 0.0
        %383 = vmatprep.subr.mxu0 0.0
        %384 = vmatpush2.xpose.msra.mxu0 0.0
        %385 = vmatprep.subr.mxu0 0.0
        %386 = vmatpush2.xpose.msra.mxu0 0.0
        %387 = vmatprep.subr.mxu0 0.0
        %388 = vmatpush2.xpose.msra.mxu0 0.0
        %389 = vmatprep.subr.mxu0 0.0
        %390 = vmatpush2.xpose.msra.mxu0 0.0
        %391 = vmatprep.subr.mxu0 0.0
        %392 = vmatpush2.xpose.msra.mxu0 0.0
        %393 = vmatprep.subr.mxu0 0.0
        %394 = vmatpush2.xpose.msra.mxu0 0.0
        %395 = vmatprep.subr.mxu0 0.0
        %396 = vmatpush2.xpose.msra.mxu0 0.0
        %397 = vmatprep.subr.mxu0 0.0
        %398 = vmatpush2.xpose.msra.mxu0 0.0
        %399 = vmatprep.subr.mxu0 0.0
        %400 = vmatpush2.xpose.msra.mxu0 0.0
        %401 = vmatprep.subr.mxu0 0.0
        %402 = vmatpush2.xpose.msra.mxu0 0.0
        %403 = vmatprep.subr.mxu0 0.0
        %404 = vmatpush2.xpose.msra.mxu0 0.0
        %405 = vmatprep.subr.mxu0 0.0
        %406 = vmatpush2.xpose.msra.mxu0 0.0
        %407 = vmatprep.subr.mxu0 0.0
        %408 = vmatpush2.xpose.msra.mxu0 0.0
        %409 = vmatprep.subr.mxu0 0.0
        %410 = vmatpush2.xpose.msra.mxu0 0.0
        %411 = vmatprep.mubr.f32.mxu0 0.0
        %412 = vmatmul.mubr.f32.gmra.mxu0 %v336
        %v413 = vpop.f32.mrf.mxu0
        %v414 = vadd.f32 0.0, %v413
        %v415 = vpop.f32.mrf.mxu0
        %416 = vmatprep.mubr.f32.mxu0 0.0
        %417 = vmatmul.mubr.f32.gmra.mxu0 %v339
        %v418 = vpop.f32.mrf.mxu0
        %v419 = vadd.f32 0.0, %v418
        %v420 = vpop.f32.mrf.mxu0
        %421 = vdwg.mxu0
        %v423 = vsel %vm334, %v312, 0
        %v426 = vsel %vm334, %v313, 0
        %v429 = vsel %vm334, %v320, 0
        %v432 = vsel %vm334, %v321, 0
        %434 = vmatprep.subr.mxu0 0.0
        %435 = vmatpush1.xpose.msra.mxu0 0.0
        %436 = vmatprep.subr.mxu0 0.0
        %437 = vmatpush1.xpose.msra.mxu0 0.0
        %438 = vmatprep.subr.mxu0 0.0
        %439 = vmatpush1.xpose.msra.mxu0 0.0
        %440 = vmatprep.subr.mxu0 0.0
        %441 = vmatpush1.xpose.msra.mxu0 0.0
        %442 = vmatprep.subr.mxu0 0.0
        %443 = vmatpush1.xpose.msra.mxu0 0.0
        %444 = vmatprep.subr.mxu0 0.0
        %445 = vmatpush1.xpose.msra.mxu0 0.0
        %446 = vmatprep.subr.mxu0 0.0
        %447 = vmatpush1.xpose.msra.mxu0 0.0
        %448 = vmatprep.subr.mxu0 0.0
        %449 = vmatpush1.xpose.msra.mxu0 0.0
        %450 = vmatprep.subr.mxu0 0.0
        %451 = vmatpush1.xpose.msra.mxu0 0.0
        %452 = vmatprep.subr.mxu0 0.0
        %453 = vmatpush1.xpose.msra.mxu0 0.0
        %454 = vmatprep.subr.mxu0 0.0
        %455 = vmatpush1.xpose.msra.mxu0 0.0
        %456 = vmatprep.subr.mxu0 0.0
        %457 = vmatpush1.xpose.msra.mxu0 0.0
        %458 = vmatprep.subr.mxu0 0.0
        %459 = vmatpush1.xpose.msra.mxu0 0.0
        %460 = vmatprep.subr.mxu0 0.0
        %461 = vmatpush1.xpose.msra.mxu0 0.0
        %462 = vmatprep.subr.mxu0 0.0
        %463 = vmatpush1.xpose.msra.mxu0 %v432
        %464 = vmatprep.subr.mxu0 0.0
        %465 = vmatpush1.xpose.msra.mxu0 %v429
        %466 = vmatprep.subr.mxu0 0.0
        %467 = vmatpush2.xpose.msra.mxu0 0.0
        %468 = vmatprep.subr.mxu0 0.0
        %469 = vmatpush2.xpose.msra.mxu0 0.0
        %470 = vmatprep.subr.mxu0 0.0
        %471 = vmatpush2.xpose.msra.mxu0 0.0
        %472 = vmatprep.subr.mxu0 0.0
        %473 = vmatpush2.xpose.msra.mxu0 0.0
        %474 = vmatprep.subr.mxu0 0.0
        %475 = vmatpush2.xpose.msra.mxu0 0.0
        %476 = vmatprep.subr.mxu0 0.0
        %477 = vmatpush2.xpose.msra.mxu0 0.0
        %478 = vmatprep.subr.mxu0 0.0
        %479 = vmatpush2.xpose.msra.mxu0 0.0
        %480 = vmatprep.subr.mxu0 0.0
        %481 = vmatpush2.xpose.msra.mxu0 0.0
        %482 = vmatprep.subr.mxu0 0.0
        %483 = vmatpush2.xpose.msra.mxu0 0.0
        %484 = vmatprep.subr.mxu0 0.0
        %485 = vmatpush2.xpose.msra.mxu0 0.0
        %486 = vmatprep.subr.mxu0 0.0
        %487 = vmatpush2.xpose.msra.mxu0 0.0
        %488 = vmatprep.subr.mxu0 0.0
        %489 = vmatpush2.xpose.msra.mxu0 0.0
        %490 = vmatprep.subr.mxu0 0.0
        %491 = vmatpush2.xpose.msra.mxu0 0.0
        %492 = vmatprep.subr.mxu0 0.0
        %493 = vmatpush2.xpose.msra.mxu0 0.0
        %494 = vmatprep.subr.mxu0 0.0
        %495 = vmatpush2.xpose.msra.mxu0 0.0
        %496 = vmatprep.subr.mxu0 0.0
        %497 = vmatpush2.xpose.msra.mxu0 0.0
        %498 = vmatprep.mubr.f32.mxu0 0.0
        %499 = vmatmul.mubr.f32.gmra.mxu0 %v423
        %v500 = vpop.f32.mrf.mxu0
        %v501 = vadd.f32 0.0, %v500
        %v502 = vpop.f32.mrf.mxu0
        %503 = vmatprep.mubr.f32.mxu0 0.0
        %504 = vmatmul.mubr.f32.gmra.mxu0 %v426
        %v505 = vpop.f32.mrf.mxu0
        %v506 = vadd.f32 0.0, %v505
        %v507 = vpop.f32.mrf.mxu0
        %508 = vdwg.mxu0
        %v510 = vsel %vm334, %v314, 0
        %v513 = vsel %vm334, %v315, 0
        %v516 = vsel %vm334, %v322, 0
        %v519 = vsel %vm334, %v323, 0
        %521 = vmatprep.subr.mxu0 0.0
        %522 = vmatpush1.xpose.msra.mxu0 0.0
        %523 = vmatprep.subr.mxu0 0.0
        %524 = vmatpush1.xpose.msra.mxu0 0.0
        %525 = vmatprep.subr.mxu0 0.0
        %526 = vmatpush1.xpose.msra.mxu0 0.0
        %527 = vmatprep.subr.mxu0 0.0
        %528 = vmatpush1.xpose.msra.mxu0 0.0
        %529 = vmatprep.subr.mxu0 0.0
        %530 = vmatpush1.xpose.msra.mxu0 0.0
        %531 = vmatprep.subr.mxu0 0.0
        %532 = vmatpush1.xpose.msra.mxu0 0.0
        %533 = vmatprep.subr.mxu0 0.0
        %534 = vmatpush1.xpose.msra.mxu0 0.0
        %535 = vmatprep.subr.mxu0 0.0
        %536 = vmatpush1.xpose.msra.mxu0 0.0
        %537 = vmatprep.subr.mxu0 0.0
        %538 = vmatpush1.xpose.msra.mxu0 0.0
        %539 = vmatprep.subr.mxu0 0.0
        %540 = vmatpush1.xpose.msra.mxu0 0.0
        %541 = vmatprep.subr.mxu0 0.0
        %542 = vmatpush1.xpose.msra.mxu0 0.0
        %543 = vmatprep.subr.mxu0 0.0
        %544 = vmatpush1.xpose.msra.mxu0 0.0
        %545 = vmatprep.subr.mxu0 0.0
        %546 = vmatpush1.xpose.msra.mxu0 0.0
        %547 = vmatprep.subr.mxu0 0.0
        %548 = vmatpush1.xpose.msra.mxu0 0.0
        %549 = vmatprep.subr.mxu0 0.0
        %550 = vmatpush1.xpose.msra.mxu0 %v519
        %551 = vmatprep.subr.mxu0 0.0
        %552 = vmatpush1.xpose.msra.mxu0 %v516
        %553 = vmatprep.subr.mxu0 0.0
        %554 = vmatpush2.xpose.msra.mxu0 0.0
        %555 = vmatprep.subr.mxu0 0.0
        %556 = vmatpush2.xpose.msra.mxu0 0.0
        %557 = vmatprep.subr.mxu0 0.0
        %558 = vmatpush2.xpose.msra.mxu0 0.0
        %559 = vmatprep.subr.mxu0 0.0
        %560 = vmatpush2.xpose.msra.mxu0 0.0
        %561 = vmatprep.subr.mxu0 0.0
        %562 = vmatpush2.xpose.msra.mxu0 0.0
        %563 = vmatprep.subr.mxu0 0.0
        %564 = vmatpush2.xpose.msra.mxu0 0.0
        %565 = vmatprep.subr.mxu0 0.0
        %566 = vmatpush2.xpose.msra.mxu0 0.0
        %567 = vmatprep.subr.mxu0 0.0
        %568 = vmatpush2.xpose.msra.mxu0 0.0
        %569 = vmatprep.subr.mxu0 0.0
        %570 = vmatpush2.xpose.msra.mxu0 0.0
        %571 = vmatprep.subr.mxu0 0.0
        %572 = vmatpush2.xpose.msra.mxu0 0.0
        %573 = vmatprep.subr.mxu0 0.0
        %574 = vmatpush2.xpose.msra.mxu0 0.0
        %575 = vmatprep.subr.mxu0 0.0
        %576 = vmatpush2.xpose.msra.mxu0 0.0
        %577 = vmatprep.subr.mxu0 0.0
        %578 = vmatpush2.xpose.msra.mxu0 0.0
        %579 = vmatprep.subr.mxu0 0.0
        %580 = vmatpush2.xpose.msra.mxu0 0.0
        %581 = vmatprep.subr.mxu0 0.0
        %582 = vmatpush2.xpose.msra.mxu0 0.0
        %583 = vmatprep.subr.mxu0 0.0
        %584 = vmatpush2.xpose.msra.mxu0 0.0
        %585 = vmatprep.mubr.f32.mxu0 0.0
        %586 = vmatmul.mubr.f32.gmra.mxu0 %v510
        %v587 = vpop.f32.mrf.mxu0
        %v588 = vadd.f32 0.0, %v587
        %v589 = vpop.f32.mrf.mxu0
        %590 = vmatprep.mubr.f32.mxu0 0.0
        %591 = vmatmul.mubr.f32.gmra.mxu0 %v513
        %v592 = vpop.f32.mrf.mxu0
        %v593 = vadd.f32 0.0, %v592
        %v594 = vpop.f32.mrf.mxu0
        %595 = vdwg.mxu0
        %v597 = vsel %vm334, %v316, 0
        %v600 = vsel %vm334, %v317, 0
        %v603 = vsel %vm334, %v324, 0
        %v606 = vsel %vm334, %v325, 0
        %608 = vmatprep.subr.mxu0 0.0
        %609 = vmatpush1.xpose.msra.mxu0 0.0
        %610 = vmatprep.subr.mxu0 0.0
        %611 = vmatpush1.xpose.msra.mxu0 0.0
        %612 = vmatprep.subr.mxu0 0.0
        %613 = vmatpush1.xpose.msra.mxu0 0.0
        %614 = vmatprep.subr.mxu0 0.0
        %615 = vmatpush1.xpose.msra.mxu0 0.0
        %616 = vmatprep.subr.mxu0 0.0
        %617 = vmatpush1.xpose.msra.mxu0 0.0
        %618 = vmatprep.subr.mxu0 0.0
        %619 = vmatpush1.xpose.msra.mxu0 0.0
        %620 = vmatprep.subr.mxu0 0.0
        %621 = vmatpush1.xpose.msra.mxu0 0.0
        %622 = vmatprep.subr.mxu0 0.0
        %623 = vmatpush1.xpose.msra.mxu0 0.0
        %624 = vmatprep.subr.mxu0 0.0
        %625 = vmatpush1.xpose.msra.mxu0 0.0
        %626 = vmatprep.subr.mxu0 0.0
        %627 = vmatpush1.xpose.msra.mxu0 0.0
        %628 = vmatprep.subr.mxu0 0.0
        %629 = vmatpush1.xpose.msra.mxu0 0.0
        %630 = vmatprep.subr.mxu0 0.0
        %631 = vmatpush1.xpose.msra.mxu0 0.0
        %632 = vmatprep.subr.mxu0 0.0
        %633 = vmatpush1.xpose.msra.mxu0 0.0
        %634 = vmatprep.subr.mxu0 0.0
        %635 = vmatpush1.xpose.msra.mxu0 0.0
        %636 = vmatprep.subr.mxu0 0.0
        %637 = vmatpush1.xpose.msra.mxu0 %v606
        %638 = vmatprep.subr.mxu0 0.0
        %639 = vmatpush1.xpose.msra.mxu0 %v603
        %640 = vmatprep.subr.mxu0 0.0
        %641 = vmatpush2.xpose.msra.mxu0 0.0
        %642 = vmatprep.subr.mxu0 0.0
        %643 = vmatpush2.xpose.msra.mxu0 0.0
        %644 = vmatprep.subr.mxu0 0.0
        %645 = vmatpush2.xpose.msra.mxu0 0.0
        %646 = vmatprep.subr.mxu0 0.0
        %647 = vmatpush2.xpose.msra.mxu0 0.0
        %648 = vmatprep.subr.mxu0 0.0
        %649 = vmatpush2.xpose.msra.mxu0 0.0
        %650 = vmatprep.subr.mxu0 0.0
        %651 = vmatpush2.xpose.msra.mxu0 0.0
        %652 = vmatprep.subr.mxu0 0.0
        %653 = vmatpush2.xpose.msra.mxu0 0.0
        %654 = vmatprep.subr.mxu0 0.0
        %655 = vmatpush2.xpose.msra.mxu0 0.0
        %656 = vmatprep.subr.mxu0 0.0
        %657 = vmatpush2.xpose.msra.mxu0 0.0
        %658 = vmatprep.subr.mxu0 0.0
        %659 = vmatpush2.xpose.msra.mxu0 0.0
        %660 = vmatprep.subr.mxu0 0.0
        %661 = vmatpush2.xpose.msra.mxu0 0.0
        %662 = vmatprep.subr.mxu0 0.0
        %663 = vmatpush2.xpose.msra.mxu0 0.0
        %664 = vmatprep.subr.mxu0 0.0
        %665 = vmatpush2.xpose.msra.mxu0 0.0
        %666 = vmatprep.subr.mxu0 0.0
        %667 = vmatpush2.xpose.msra.mxu0 0.0
        %668 = vmatprep.subr.mxu0 0.0
        %669 = vmatpush2.xpose.msra.mxu0 0.0
        %670 = vmatprep.subr.mxu0 0.0
        %671 = vmatpush2.xpose.msra.mxu0 0.0
        %672 = vmatprep.mubr.f32.mxu0 0.0
        %673 = vmatmul.mubr.f32.gmra.mxu0 %v597
        %v674 = vpop.f32.mrf.mxu0
        %v675 = vadd.f32 0.0, %v674
        %v676 = vpop.f32.mrf.mxu0
        %677 = vmatprep.mubr.f32.mxu0 0.0
        %678 = vmatmul.mubr.f32.gmra.mxu0 %v600
        %v679 = vpop.f32.mrf.mxu0
        %v680 = vadd.f32 0.0, %v679
        %v681 = vpop.f32.mrf.mxu0
        %682 = vdwg.mxu0
        %v683 = vmul.f32 %v414, 0.17677669
        %v684 = vmul.f32 %v419, 0.17677669
        %v685 = vmul.f32 %v501, 0.17677669
        %v686 = vmul.f32 %v506, 0.17677669
        %v687 = vmul.f32 %v588, 0.17677669
        %v688 = vmul.f32 %v593, 0.17677669
        %v689 = vmul.f32 %v675, 0.17677669
        %v690 = vmul.f32 %v680, 0.17677669
        %vm691 = vcmask 130048
        %v692 = vsel %vm691, %v683, -inf
        %693 = vmax.xlane.f32.xlu0 %v692
        %v694 = vpop.xlane.xlu0 %693
        %v695 = vsel %vm691, %v684, -inf
        %696 = vmax.xlane.f32.xlu0 %v695
        %v697 = vpop.xlane.xlu0 %696
        %v698 = vsel %vm691, %v685, -inf
        %699 = vmax.xlane.f32.xlu0 %v698
        %v700 = vpop.xlane.xlu0 %699
        %v701 = vsel %vm691, %v686, -inf
        %702 = vmax.xlane.f32.xlu0 %v701
        %v703 = vpop.xlane.xlu0 %702
        %v704 = vsel %vm691, %v687, -inf
        %705 = vmax.xlane.f32.xlu0 %v704
        %v706 = vpop.xlane.xlu0 %705
        %v707 = vsel %vm691, %v688, -inf
        %708 = vmax.xlane.f32.xlu0 %v707
        %v709 = vpop.xlane.xlu0 %708
        %v710 = vsel %vm691, %v689, -inf
        %711 = vmax.xlane.f32.xlu0 %v710
        %v712 = vpop.xlane.xlu0 %711
        %v713 = vsel %vm691, %v690, -inf
        %714 = vmax.xlane.f32.xlu0 %v713
        %v715 = vpop.xlane.xlu0 %714
        %v716 = vsub.f32 %v683, %v694
        %v717 = vsub.f32 %v684, %v697
        %v718 = vsub.f32 %v685, %v700
        %v719 = vsub.f32 %v686, %v703
        %v720 = vsub.f32 %v687, %v706
        %v721 = vsub.f32 %v688, %v709
        %v722 = vsub.f32 %v689, %v712
        %v723 = vsub.f32 %v690, %v715
        %v724 = vmul.f32 %v716, 1.442695
        %v725 = vpow.pop %v724
        %v726 = vmul.f32 %v717, 1.442695
        %v727 = vpow.pop %v726
        %v728 = vmul.f32 %v718, 1.442695
        %v729 = vpow.pop %v728
        %v730 = vmul.f32 %v719, 1.442695
        %v731 = vpow.pop %v730
        %v732 = vmul.f32 %v720, 1.442695
        %v733 = vpow.pop %v732
        %v734 = vmul.f32 %v721, 1.442695
        %v735 = vpow.pop %v734
        %v736 = vmul.f32 %v722, 1.442695
        %v737 = vpow.pop %v736
        %v738 = vmul.f32 %v723, 1.442695
        %v739 = vpow.pop %v738
        %v740 = vsel %vm691, %v725, 0.0
        %741 = vadd.xlane.f32.xlu0 %v740
        %v742 = vpop.xlane.xlu0 %741
        %v743 = vsel %vm691, %v727, 0.0
        %744 = vadd.xlane.f32.xlu0 %v743
        %v745 = vpop.xlane.xlu0 %744
        %v746 = vsel %vm691, %v729, 0.0
        %747 = vadd.xlane.f32.xlu0 %v746
        %v748 = vpop.xlane.xlu0 %747
        %v749 = vsel %vm691, %v731, 0.0
        %750 = vadd.xlane.f32.xlu0 %v749
        %v751 = vpop.xlane.xlu0 %750
        %v752 = vsel %vm691, %v733, 0.0
        %753 = vadd.xlane.f32.xlu0 %v752
        %v754 = vpop.xlane.xlu0 %753
        %v755 = vsel %vm691, %v735, 0.0
        %756 = vadd.xlane.f32.xlu0 %v755
        %v757 = vpop.xlane.xlu0 %756
        %v758 = vsel %vm691, %v737, 0.0
        %759 = vadd.xlane.f32.xlu0 %v758
        %v760 = vpop.xlane.xlu0 %759
        %v761 = vsel %vm691, %v739, 0.0
        %762 = vadd.xlane.f32.xlu0 %v761
        %v763 = vpop.xlane.xlu0 %762
        %v764 = vrcp.pop %v742
        %v765 = vmul.f32 %v725, %v764
        %v766 = vrcp.pop %v745
        %v767 = vmul.f32 %v727, %v766
        %v768 = vrcp.pop %v748
        %v769 = vmul.f32 %v729, %v768
        %v770 = vrcp.pop %v751
        %v771 = vmul.f32 %v731, %v770
        %v772 = vrcp.pop %v754
        %v773 = vmul.f32 %v733, %v772
        %v774 = vrcp.pop %v757
        %v775 = vmul.f32 %v735, %v774
        %v776 = vrcp.pop %v760
        %v777 = vmul.f32 %v737, %v776
        %v778 = vrcp.pop %v763
        %v779 = vmul.f32 %v739, %v778
        %v780 = vcombine.low %v765, %v773
        %v781 = vcombine.high %v765, %v773
        %v783 = vunpack.c.l.s4 1983009808
        %v784 = vunpack.c.0.s8 %v783
        %v785 = vlaneseq
        %v786 = vshrl.u32 %v785, 7
        %v787 = vsub.s32 %v784, %v786
        %v788 = vrot.slane %v780, %v787
        %v790 = vunpack.c.l.s4 1983009808
        %v791 = vunpack.c.0.s8 %v790
        %v792 = vlaneseq
        %v793 = vshrl.u32 %v792, 7
        %v794 = vsub.s32 %v791, %v793
        %v795 = vrot.slane %v781, %v794
        %v796 = vcombine.low %v769, %v777
        %v797 = vcombine.high %v769, %v777
        %v799 = vunpack.c.l.s4 1983009808
        %v800 = vunpack.c.0.s8 %v799
        %v801 = vlaneseq
        %v802 = vshrl.u32 %v801, 7
        %v803 = vsub.s32 %v800, %v802
        %v804 = vrot.slane %v796, %v803
        %v806 = vunpack.c.l.s4 1983009808
        %v807 = vunpack.c.0.s8 %v806
        %v808 = vlaneseq
        %v809 = vshrl.u32 %v808, 7
        %v810 = vsub.s32 %v807, %v809
        %v811 = vrot.slane %v797, %v810
        %v812 = vcombine.low %v788, %v804
        %v813 = vcombine.high %v788, %v804
        %v815 = vunpack.c.l.s4 1934713408
        %v816 = vunpack.c.0.s8 %v815
        %v817 = vlaneseq
        %v818 = vshrl.u32 %v817, 7
        %v819 = vsub.s32 %v816, %v818
        %v820 = vrot.slane %v812, %v819
        %v822 = vunpack.c.l.s4 1934713408
        %v823 = vunpack.c.0.s8 %v822
        %v824 = vlaneseq
        %v825 = vshrl.u32 %v824, 7
        %v826 = vsub.s32 %v823, %v825
        %v827 = vrot.slane %v813, %v826
        %v828 = vcombine.low %v795, %v811
        %v829 = vcombine.high %v795, %v811
        %v831 = vunpack.c.l.s4 1934713408
        %v832 = vunpack.c.0.s8 %v831
        %v833 = vlaneseq
        %v834 = vshrl.u32 %v833, 7
        %v835 = vsub.s32 %v832, %v834
        %v836 = vrot.slane %v828, %v835
        %v838 = vunpack.c.l.s4 1934713408
        %v839 = vunpack.c.0.s8 %v838
        %v840 = vlaneseq
        %v841 = vshrl.u32 %v840, 7
        %v842 = vsub.s32 %v839, %v841
        %v843 = vrot.slane %v829, %v842
        %v844 = vcombine.high %v820, 0.0
        %v845 = vcombine.high %v827, 0.0
        %v846 = vcombine.high %v836, 0.0
        %v847 = vcombine.high %v843, 0.0
        %v848 = vcombine.low %v767, %v775
        %v849 = vcombine.high %v767, %v775
        %v851 = vunpack.c.l.s4 1983009808
        %v852 = vunpack.c.0.s8 %v851
        %v853 = vlaneseq
        %v854 = vshrl.u32 %v853, 7
        %v855 = vsub.s32 %v852, %v854
        %v856 = vrot.slane %v848, %v855
        %v858 = vunpack.c.l.s4 1983009808
        %v859 = vunpack.c.0.s8 %v858
        %v860 = vlaneseq
        %v861 = vshrl.u32 %v860, 7
        %v862 = vsub.s32 %v859, %v861
        %v863 = vrot.slane %v849, %v862
        %v864 = vcombine.low %v771, %v779
        %v865 = vcombine.high %v771, %v779
        %v867 = vunpack.c.l.s4 1983009808
        %v868 = vunpack.c.0.s8 %v867
        %v869 = vlaneseq
        %v870 = vshrl.u32 %v869, 7
        %v871 = vsub.s32 %v868, %v870
        %v872 = vrot.slane %v864, %v871
        %v874 = vunpack.c.l.s4 1983009808
        %v875 = vunpack.c.0.s8 %v874
        %v876 = vlaneseq
        %v877 = vshrl.u32 %v876, 7
        %v878 = vsub.s32 %v875, %v877
        %v879 = vrot.slane %v865, %v878
        %v880 = vcombine.low %v856, %v872
        %v881 = vcombine.high %v856, %v872
        %v883 = vunpack.c.l.s4 1934713408
        %v884 = vunpack.c.0.s8 %v883
        %v885 = vlaneseq
        %v886 = vshrl.u32 %v885, 7
        %v887 = vsub.s32 %v884, %v886
        %v888 = vrot.slane %v880, %v887
        %v890 = vunpack.c.l.s4 1934713408
        %v891 = vunpack.c.0.s8 %v890
        %v892 = vlaneseq
        %v893 = vshrl.u32 %v892, 7
        %v894 = vsub.s32 %v891, %v893
        %v895 = vrot.slane %v881, %v894
        %v896 = vcombine.low %v863, %v879
        %v897 = vcombine.high %v863, %v879
        %v899 = vunpack.c.l.s4 1934713408
        %v900 = vunpack.c.0.s8 %v899
        %v901 = vlaneseq
        %v902 = vshrl.u32 %v901, 7
        %v903 = vsub.s32 %v900, %v902
        %v904 = vrot.slane %v896, %v903
        %v906 = vunpack.c.l.s4 1934713408
        %v907 = vunpack.c.0.s8 %v906
        %v908 = vlaneseq
        %v909 = vshrl.u32 %v908, 7
        %v910 = vsub.s32 %v907, %v909
        %v911 = vrot.slane %v897, %v910
        %v912 = vcombine.high %v888, 0.0
        %v913 = vcombine.high %v895, 0.0
        %v914 = vcombine.high %v904, 0.0
        %v915 = vcombine.high %v911, 0.0
        %917 = vrot.lane.b32.xlu0 %v844, 16
        %v918 = vpop.permute.xlu0 %917
        %921 = vrot.lane.b32.xlu0 %v827, 32
        %v922 = vpop.permute.xlu0 %921
        %925 = vrot.lane.b32.xlu0 %v845, 48
        %v926 = vpop.permute.xlu0 %925
        %929 = vrot.lane.b32.xlu0 %v836, 64
        %v930 = vpop.permute.xlu0 %929
        %933 = vrot.lane.b32.xlu0 %v846, 80
        %v934 = vpop.permute.xlu0 %933
        %937 = vrot.lane.b32.xlu0 %v843, 96
        %v938 = vpop.permute.xlu0 %937
        %941 = vrot.lane.b32.xlu0 %v847, 112
        %v942 = vpop.permute.xlu0 %941
        %945 = vrot.lane.b32.xlu0 %v912, 16
        %v946 = vpop.permute.xlu0 %945
        %949 = vrot.lane.b32.xlu0 %v895, 32
        %v950 = vpop.permute.xlu0 %949
        %953 = vrot.lane.b32.xlu0 %v913, 48
        %v954 = vpop.permute.xlu0 %953
        %957 = vrot.lane.b32.xlu0 %v904, 64
        %v958 = vpop.permute.xlu0 %957
        %961 = vrot.lane.b32.xlu0 %v914, 80
        %v962 = vpop.permute.xlu0 %961
        %965 = vrot.lane.b32.xlu0 %v911, 96
        %v966 = vpop.permute.xlu0 %965
        %969 = vrot.lane.b32.xlu0 %v915, 112
        %v970 = vpop.permute.xlu0 %969
        %v972 = vsel %vm691, %v820, %v918
        %v973 = vsel %vm334, %v972, %v922
        %vm974 = vcmask 392192
        %v975 = vsel %vm974, %v973, %v926
        %vm976 = vcmask 523264
        %v977 = vsel %vm976, %v975, %v930
        %vm978 = vcmask 654336
        %v979 = vsel %vm978, %v977, %v934
        %vm980 = vcmask 785408
        %v981 = vsel %vm980, %v979, %v938
        %vm982 = vcmask 916480
        %v983 = vsel %vm982, %v981, %v942
        %v984 = vsel %vm691, %v888, %v946
        %v985 = vsel %vm334, %v984, %v950
        %v986 = vsel %vm974, %v985, %v954
        %v987 = vsel %vm976, %v986, %v958
        %v988 = vsel %vm978, %v987, %v962
        %v989 = vsel %vm980, %v988, %v966
        %v990 = vsel %vm982, %v989, %v970
        %v993 = vcombine.low %v983, %v990
        %995 = vst [vmem:[%s306] sm:$0xff] %v993
        %v997 = vsel %vm691, %v765, 0
        %v1000 = vsel %vm691, %v767, 0
        %1002 = vmatprep.subr.mxu0 0.0
        %1003 = vmatpush1.msra.mxu0 0.0
        %1004 = vmatprep.subr.mxu0 0.0
        %1005 = vmatpush1.msra.mxu0 0.0
        %1006 = vmatprep.subr.mxu0 0.0
        %1007 = vmatpush1.msra.mxu0 0.0
        %1008 = vmatprep.subr.mxu0 0.0
        %1009 = vmatpush1.msra.mxu0 0.0
        %1010 = vmatprep.subr.mxu0 0.0
        %1011 = vmatpush1.msra.mxu0 0.0
        %1012 = vmatprep.subr.mxu0 0.0
        %1013 = vmatpush1.msra.mxu0 0.0
        %1014 = vmatprep.subr.mxu0 0.0
        %1015 = vmatpush1.msra.mxu0 0.0
        %1016 = vmatprep.subr.mxu0 0.0
        %1017 = vmatpush1.msra.mxu0 0.0
        %1018 = vmatprep.subr.mxu0 0.0
        %1019 = vmatpush1.msra.mxu0 0.0
        %1020 = vmatprep.subr.mxu0 0.0
        %1021 = vmatpush1.msra.mxu0 0.0
        %1022 = vmatprep.subr.mxu0 0.0
        %1023 = vmatpush1.msra.mxu0 0.0
        %1024 = vmatprep.subr.mxu0 0.0
        %1025 = vmatpush1.msra.mxu0 0.0
        %1026 = vmatprep.subr.mxu0 0.0
        %1027 = vmatpush1.msra.mxu0 0.0
        %1028 = vmatprep.subr.mxu0 0.0
        %1029 = vmatpush1.msra.mxu0 0.0
        %1030 = vmatprep.subr.mxu0 0.0
        %1031 = vmatpush1.msra.mxu0 %v327
        %1032 = vmatprep.subr.mxu0 0.0
        %1033 = vmatpush1.msra.mxu0 %v326
        %1034 = vmatprep.subr.mxu0 0.0
        %1035 = vmatpush2.msra.mxu0 0.0
        %1036 = vmatprep.subr.mxu0 0.0
        %1037 = vmatpush2.msra.mxu0 0.0
        %1038 = vmatprep.subr.mxu0 0.0
        %1039 = vmatpush2.msra.mxu0 0.0
        %1040 = vmatprep.subr.mxu0 0.0
        %1041 = vmatpush2.msra.mxu0 0.0
        %1042 = vmatprep.subr.mxu0 0.0
        %1043 = vmatpush2.msra.mxu0 0.0
        %1044 = vmatprep.subr.mxu0 0.0
        %1045 = vmatpush2.msra.mxu0 0.0
        %1046 = vmatprep.subr.mxu0 0.0
        %1047 = vmatpush2.msra.mxu0 0.0
        %1048 = vmatprep.subr.mxu0 0.0
        %1049 = vmatpush2.msra.mxu0 0.0
        %1050 = vmatprep.subr.mxu0 0.0
        %1051 = vmatpush2.msra.mxu0 0.0
        %1052 = vmatprep.subr.mxu0 0.0
        %1053 = vmatpush2.msra.mxu0 0.0
        %1054 = vmatprep.subr.mxu0 0.0
        %1055 = vmatpush2.msra.mxu0 0.0
        %1056 = vmatprep.subr.mxu0 0.0
        %1057 = vmatpush2.msra.mxu0 0.0
        %1058 = vmatprep.subr.mxu0 0.0
        %1059 = vmatpush2.msra.mxu0 0.0
        %1060 = vmatprep.subr.mxu0 0.0
        %1061 = vmatpush2.msra.mxu0 0.0
        %1062 = vmatprep.subr.mxu0 0.0
        %1063 = vmatpush2.msra.mxu0 0.0
        %1064 = vmatprep.subr.mxu0 0.0
        %1065 = vmatpush2.msra.mxu0 0.0
        %1066 = vmatprep.mubr.f32.mxu0 0.0
        %1067 = vmatmul.mubr.f32.gmra.mxu0 %v997
        %v1068 = vpop.f32.mrf.mxu0
        %v1069 = vadd.f32 0.0, %v1068
        %v1070 = vpop.f32.mrf.mxu0
        %1071 = vmatprep.mubr.f32.mxu0 0.0
        %1072 = vmatmul.mubr.f32.gmra.mxu0 %v1000
        %v1073 = vpop.f32.mrf.mxu0
        %v1074 = vadd.f32 0.0, %v1073
        %v1075 = vpop.f32.mrf.mxu0
        %1076 = vdwg.mxu0
        %v1078 = vsel %vm691, %v769, 0
        %v1081 = vsel %vm691, %v771, 0
        %1083 = vmatprep.subr.mxu0 0.0
        %1084 = vmatpush1.msra.mxu0 0.0
        %1085 = vmatprep.subr.mxu0 0.0
        %1086 = vmatpush1.msra.mxu0 0.0
        %1087 = vmatprep.subr.mxu0 0.0
        %1088 = vmatpush1.msra.mxu0 0.0
        %1089 = vmatprep.subr.mxu0 0.0
        %1090 = vmatpush1.msra.mxu0 0.0
        %1091 = vmatprep.subr.mxu0 0.0
        %1092 = vmatpush1.msra.mxu0 0.0
        %1093 = vmatprep.subr.mxu0 0.0
        %1094 = vmatpush1.msra.mxu0 0.0
        %1095 = vmatprep.subr.mxu0 0.0
        %1096 = vmatpush1.msra.mxu0 0.0
        %1097 = vmatprep.subr.mxu0 0.0
        %1098 = vmatpush1.msra.mxu0 0.0
        %1099 = vmatprep.subr.mxu0 0.0
        %1100 = vmatpush1.msra.mxu0 0.0
        %1101 = vmatprep.subr.mxu0 0.0
        %1102 = vmatpush1.msra.mxu0 0.0
        %1103 = vmatprep.subr.mxu0 0.0
        %1104 = vmatpush1.msra.mxu0 0.0
        %1105 = vmatprep.subr.mxu0 0.0
        %1106 = vmatpush1.msra.mxu0 0.0
        %1107 = vmatprep.subr.mxu0 0.0
        %1108 = vmatpush1.msra.mxu0 0.0
        %1109 = vmatprep.subr.mxu0 0.0
        %1110 = vmatpush1.msra.mxu0 0.0
        %1111 = vmatprep.subr.mxu0 0.0
        %1112 = vmatpush1.msra.mxu0 %v329
        %1113 = vmatprep.subr.mxu0 0.0
        %1114 = vmatpush1.msra.mxu0 %v328
        %1115 = vmatprep.subr.mxu0 0.0
        %1116 = vmatpush2.msra.mxu0 0.0
        %1117 = vmatprep.subr.mxu0 0.0
        %1118 = vmatpush2.msra.mxu0 0.0
        %1119 = vmatprep.subr.mxu0 0.0
        %1120 = vmatpush2.msra.mxu0 0.0
        %1121 = vmatprep.subr.mxu0 0.0
        %1122 = vmatpush2.msra.mxu0 0.0
        %1123 = vmatprep.subr.mxu0 0.0
        %1124 = vmatpush2.msra.mxu0 0.0
        %1125 = vmatprep.subr.mxu0 0.0
        %1126 = vmatpush2.msra.mxu0 0.0
        %1127 = vmatprep.subr.mxu0 0.0
        %1128 = vmatpush2.msra.mxu0 0.0
        %1129 = vmatprep.subr.mxu0 0.0
        %1130 = vmatpush2.msra.mxu0 0.0
        %1131 = vmatprep.subr.mxu0 0.0
        %1132 = vmatpush2.msra.mxu0 0.0
        %1133 = vmatprep.subr.mxu0 0.0
        %1134 = vmatpush2.msra.mxu0 0.0
        %1135 = vmatprep.subr.mxu0 0.0
        %1136 = vmatpush2.msra.mxu0 0.0
        %1137 = vmatprep.subr.mxu0 0.0
        %1138 = vmatpush2.msra.mxu0 0.0
        %1139 = vmatprep.subr.mxu0 0.0
        %1140 = vmatpush2.msra.mxu0 0.0
        %1141 = vmatprep.subr.mxu0 0.0
        %1142 = vmatpush2.msra.mxu0 0.0
        %1143 = vmatprep.subr.mxu0 0.0
        %1144 = vmatpush2.msra.mxu0 0.0
        %1145 = vmatprep.subr.mxu0 0.0
        %1146 = vmatpush2.msra.mxu0 0.0
        %1147 = vmatprep.mubr.f32.mxu0 0.0
        %1148 = vmatmul.mubr.f32.gmra.mxu0 %v1078
        %v1149 = vpop.f32.mrf.mxu0
        %v1150 = vadd.f32 0.0, %v1149
        %v1151 = vpop.f32.mrf.mxu0
        %1152 = vmatprep.mubr.f32.mxu0 0.0
        %1153 = vmatmul.mubr.f32.gmra.mxu0 %v1081
        %v1154 = vpop.f32.mrf.mxu0
        %v1155 = vadd.f32 0.0, %v1154
        %v1156 = vpop.f32.mrf.mxu0
        %1157 = vdwg.mxu0
        %v1159 = vsel %vm691, %v773, 0
        %v1162 = vsel %vm691, %v775, 0
        %1164 = vmatprep.subr.mxu0 0.0
        %1165 = vmatpush1.msra.mxu0 0.0
        %1166 = vmatprep.subr.mxu0 0.0
        %1167 = vmatpush1.msra.mxu0 0.0
        %1168 = vmatprep.subr.mxu0 0.0
        %1169 = vmatpush1.msra.mxu0 0.0
        %1170 = vmatprep.subr.mxu0 0.0
        %1171 = vmatpush1.msra.mxu0 0.0
        %1172 = vmatprep.subr.mxu0 0.0
        %1173 = vmatpush1.msra.mxu0 0.0
        %1174 = vmatprep.subr.mxu0 0.0
        %1175 = vmatpush1.msra.mxu0 0.0
        %1176 = vmatprep.subr.mxu0 0.0
        %1177 = vmatpush1.msra.mxu0 0.0
        %1178 = vmatprep.subr.mxu0 0.0
        %1179 = vmatpush1.msra.mxu0 0.0
        %1180 = vmatprep.subr.mxu0 0.0
        %1181 = vmatpush1.msra.mxu0 0.0
        %1182 = vmatprep.subr.mxu0 0.0
        %1183 = vmatpush1.msra.mxu0 0.0
        %1184 = vmatprep.subr.mxu0 0.0
        %1185 = vmatpush1.msra.mxu0 0.0
        %1186 = vmatprep.subr.mxu0 0.0
        %1187 = vmatpush1.msra.mxu0 0.0
        %1188 = vmatprep.subr.mxu0 0.0
        %1189 = vmatpush1.msra.mxu0 0.0
        %1190 = vmatprep.subr.mxu0 0.0
        %1191 = vmatpush1.msra.mxu0 0.0
        %1192 = vmatprep.subr.mxu0 0.0
        %1193 = vmatpush1.msra.mxu0 %v331
        %1194 = vmatprep.subr.mxu0 0.0
        %1195 = vmatpush1.msra.mxu0 %v330
        %1196 = vmatprep.subr.mxu0 0.0
        %1197 = vmatpush2.msra.mxu0 0.0
        %1198 = vmatprep.subr.mxu0 0.0
        %1199 = vmatpush2.msra.mxu0 0.0
        %1200 = vmatprep.subr.mxu0 0.0
        %1201 = vmatpush2.msra.mxu0 0.0
        %1202 = vmatprep.subr.mxu0 0.0
        %1203 = vmatpush2.msra.mxu0 0.0
        %1204 = vmatprep.subr.mxu0 0.0
        %1205 = vmatpush2.msra.mxu0 0.0
        %1206 = vmatprep.subr.mxu0 0.0
        %1207 = vmatpush2.msra.mxu0 0.0
        %1208 = vmatprep.subr.mxu0 0.0
        %1209 = vmatpush2.msra.mxu0 0.0
        %1210 = vmatprep.subr.mxu0 0.0
        %1211 = vmatpush2.msra.mxu0 0.0
        %1212 = vmatprep.subr.mxu0 0.0
        %1213 = vmatpush2.msra.mxu0 0.0
        %1214 = vmatprep.subr.mxu0 0.0
        %1215 = vmatpush2.msra.mxu0 0.0
        %1216 = vmatprep.subr.mxu0 0.0
        %1217 = vmatpush2.msra.mxu0 0.0
        %1218 = vmatprep.subr.mxu0 0.0
        %1219 = vmatpush2.msra.mxu0 0.0
        %1220 = vmatprep.subr.mxu0 0.0
        %1221 = vmatpush2.msra.mxu0 0.0
        %1222 = vmatprep.subr.mxu0 0.0
        %1223 = vmatpush2.msra.mxu0 0.0
        %1224 = vmatprep.subr.mxu0 0.0
        %1225 = vmatpush2.msra.mxu0 0.0
        %1226 = vmatprep.subr.mxu0 0.0
        %1227 = vmatpush2.msra.mxu0 0.0
        %1228 = vmatprep.mubr.f32.mxu0 0.0
        %1229 = vmatmul.mubr.f32.gmra.mxu0 %v1159
        %v1230 = vpop.f32.mrf.mxu0
        %v1231 = vadd.f32 0.0, %v1230
        %v1232 = vpop.f32.mrf.mxu0
        %1233 = vmatprep.mubr.f32.mxu0 0.0
        %1234 = vmatmul.mubr.f32.gmra.mxu0 %v1162
        %v1235 = vpop.f32.mrf.mxu0
        %v1236 = vadd.f32 0.0, %v1235
        %v1237 = vpop.f32.mrf.mxu0
        %1238 = vdwg.mxu0
        %v1240 = vsel %vm691, %v777, 0
        %v1243 = vsel %vm691, %v779, 0
        %1245 = vmatprep.subr.mxu0 0.0
        %1246 = vmatpush1.msra.mxu0 0.0
        %1247 = vmatprep.subr.mxu0 0.0
        %1248 = vmatpush1.msra.mxu0 0.0
        %1249 = vmatprep.subr.mxu0 0.0
        %1250 = vmatpush1.msra.mxu0 0.0
        %1251 = vmatprep.subr.mxu0 0.0
        %1252 = vmatpush1.msra.mxu0 0.0
        %1253 = vmatprep.subr.mxu0 0.0
        %1254 = vmatpush1.msra.mxu0 0.0
        %1255 = vmatprep.subr.mxu0 0.0
        %1256 = vmatpush1.msra.mxu0 0.0
        %1257 = vmatprep.subr.mxu0 0.0
        %1258 = vmatpush1.msra.mxu0 0.0
        %1259 = vmatprep.subr.mxu0 0.0
        %1260 = vmatpush1.msra.mxu0 0.0
        %1261 = vmatprep.subr.mxu0 0.0
        %1262 = vmatpush1.msra.mxu0 0.0
        %1263 = vmatprep.subr.mxu0 0.0
        %1264 = vmatpush1.msra.mxu0 0.0
        %1265 = vmatprep.subr.mxu0 0.0
        %1266 = vmatpush1.msra.mxu0 0.0
        %1267 = vmatprep.subr.mxu0 0.0
        %1268 = vmatpush1.msra.mxu0 0.0
        %1269 = vmatprep.subr.mxu0 0.0
        %1270 = vmatpush1.msra.mxu0 0.0
        %1271 = vmatprep.subr.mxu0 0.0
        %1272 = vmatpush1.msra.mxu0 0.0
        %1273 = vmatprep.subr.mxu0 0.0
        %1274 = vmatpush1.msra.mxu0 %v333
        %1275 = vmatprep.subr.mxu0 0.0
        %1276 = vmatpush1.msra.mxu0 %v332
        %1277 = vmatprep.subr.mxu0 0.0
        %1278 = vmatpush2.msra.mxu0 0.0
        %1279 = vmatprep.subr.mxu0 0.0
        %1280 = vmatpush2.msra.mxu0 0.0
        %1281 = vmatprep.subr.mxu0 0.0
        %1282 = vmatpush2.msra.mxu0 0.0
        %1283 = vmatprep.subr.mxu0 0.0
        %1284 = vmatpush2.msra.mxu0 0.0
        %1285 = vmatprep.subr.mxu0 0.0
        %1286 = vmatpush2.msra.mxu0 0.0
        %1287 = vmatprep.subr.mxu0 0.0
        %1288 = vmatpush2.msra.mxu0 0.0
        %1289 = vmatprep.subr.mxu0 0.0
        %1290 = vmatpush2.msra.mxu0 0.0
        %1291 = vmatprep.subr.mxu0 0.0
        %1292 = vmatpush2.msra.mxu0 0.0
        %1293 = vmatprep.subr.mxu0 0.0
        %1294 = vmatpush2.msra.mxu0 0.0
        %1295 = vmatprep.subr.mxu0 0.0
        %1296 = vmatpush2.msra.mxu0 0.0
        %1297 = vmatprep.subr.mxu0 0.0
        %1298 = vmatpush2.msra.mxu0 0.0
        %1299 = vmatprep.subr.mxu0 0.0
        %1300 = vmatpush2.msra.mxu0 0.0
        %1301 = vmatprep.subr.mxu0 0.0
        %1302 = vmatpush2.msra.mxu0 0.0
        %1303 = vmatprep.subr.mxu0 0.0
        %1304 = vmatpush2.msra.mxu0 0.0
        %1305 = vmatprep.subr.mxu0 0.0
        %1306 = vmatpush2.msra.mxu0 0.0
        %1307 = vmatprep.subr.mxu0 0.0
        %1308 = vmatpush2.msra.mxu0 0.0
        %1309 = vmatprep.mubr.f32.mxu0 0.0
        %1310 = vmatmul.mubr.f32.gmra.mxu0 %v1240
        %v1311 = vpop.f32.mrf.mxu0
        %v1312 = vadd.f32 0.0, %v1311
        %v1313 = vpop.f32.mrf.mxu0
        %1314 = vmatprep.mubr.f32.mxu0 0.0
        %1315 = vmatmul.mubr.f32.gmra.mxu0 %v1243
        %v1316 = vpop.f32.mrf.mxu0
        %v1317 = vadd.f32 0.0, %v1316
        %v1318 = vpop.f32.mrf.mxu0
        %1319 = vdwg.mxu0
        %v1320 = vcombine.low %v1069, %v1231
        %v1321 = vcombine.high %v1069, %v1231
        %v1323 = vunpack.c.l.s4 1983009808
        %v1324 = vunpack.c.0.s8 %v1323
        %v1325 = vlaneseq
        %v1326 = vshrl.u32 %v1325, 7
        %v1327 = vsub.s32 %v1324, %v1326
        %v1328 = vrot.slane %v1320, %v1327
        %v1330 = vunpack.c.l.s4 1983009808
        %v1331 = vunpack.c.0.s8 %v1330
        %v1332 = vlaneseq
        %v1333 = vshrl.u32 %v1332, 7
        %v1334 = vsub.s32 %v1331, %v1333
        %v1335 = vrot.slane %v1321, %v1334
        %v1336 = vcombine.low %v1150, %v1312
        %v1337 = vcombine.high %v1150, %v1312
        %v1339 = vunpack.c.l.s4 1983009808
        %v1340 = vunpack.c.0.s8 %v1339
        %v1341 = vlaneseq
        %v1342 = vshrl.u32 %v1341, 7
        %v1343 = vsub.s32 %v1340, %v1342
        %v1344 = vrot.slane %v1336, %v1343
        %v1346 = vunpack.c.l.s4 1983009808
        %v1347 = vunpack.c.0.s8 %v1346
        %v1348 = vlaneseq
        %v1349 = vshrl.u32 %v1348, 7
        %v1350 = vsub.s32 %v1347, %v1349
        %v1351 = vrot.slane %v1337, %v1350
        %v1352 = vcombine.low %v1328, %v1344
        %v1353 = vcombine.high %v1328, %v1344
        %v1355 = vunpack.c.l.s4 1934713408
        %v1356 = vunpack.c.0.s8 %v1355
        %v1357 = vlaneseq
        %v1358 = vshrl.u32 %v1357, 7
        %v1359 = vsub.s32 %v1356, %v1358
        %v1360 = vrot.slane %v1352, %v1359
        %v1362 = vunpack.c.l.s4 1934713408
        %v1363 = vunpack.c.0.s8 %v1362
        %v1364 = vlaneseq
        %v1365 = vshrl.u32 %v1364, 7
        %v1366 = vsub.s32 %v1363, %v1365
        %v1367 = vrot.slane %v1353, %v1366
        %v1368 = vcombine.low %v1335, %v1351
        %v1369 = vcombine.high %v1335, %v1351
        %v1371 = vunpack.c.l.s4 1934713408
        %v1372 = vunpack.c.0.s8 %v1371
        %v1373 = vlaneseq
        %v1374 = vshrl.u32 %v1373, 7
        %v1375 = vsub.s32 %v1372, %v1374
        %v1376 = vrot.slane %v1368, %v1375
        %v1378 = vunpack.c.l.s4 1934713408
        %v1379 = vunpack.c.0.s8 %v1378
        %v1380 = vlaneseq
        %v1381 = vshrl.u32 %v1380, 7
        %v1382 = vsub.s32 %v1379, %v1381
        %v1383 = vrot.slane %v1369, %v1382
        %v1384 = vcombine.high %v1360, 0.0
        %v1385 = vcombine.high %v1367, 0.0
        %v1386 = vcombine.high %v1376, 0.0
        %v1387 = vcombine.high %v1383, 0.0
        %v1388 = vcombine.low %v1074, %v1236
        %v1389 = vcombine.high %v1074, %v1236
        %v1391 = vunpack.c.l.s4 1983009808
        %v1392 = vunpack.c.0.s8 %v1391
        %v1393 = vlaneseq
        %v1394 = vshrl.u32 %v1393, 7
        %v1395 = vsub.s32 %v1392, %v1394
        %v1396 = vrot.slane %v1388, %v1395
        %v1398 = vunpack.c.l.s4 1983009808
        %v1399 = vunpack.c.0.s8 %v1398
        %v1400 = vlaneseq
        %v1401 = vshrl.u32 %v1400, 7
        %v1402 = vsub.s32 %v1399, %v1401
        %v1403 = vrot.slane %v1389, %v1402
        %v1404 = vcombine.low %v1155, %v1317
        %v1405 = vcombine.high %v1155, %v1317
        %v1407 = vunpack.c.l.s4 1983009808
        %v1408 = vunpack.c.0.s8 %v1407
        %v1409 = vlaneseq
        %v1410 = vshrl.u32 %v1409, 7
        %v1411 = vsub.s32 %v1408, %v1410
        %v1412 = vrot.slane %v1404, %v1411
        %v1414 = vunpack.c.l.s4 1983009808
        %v1415 = vunpack.c.0.s8 %v1414
        %v1416 = vlaneseq
        %v1417 = vshrl.u32 %v1416, 7
        %v1418 = vsub.s32 %v1415, %v1417
        %v1419 = vrot.slane %v1405, %v1418
        %v1420 = vcombine.low %v1396, %v1412
        %v1421 = vcombine.high %v1396, %v1412
        %v1423 = vunpack.c.l.s4 1934713408
        %v1424 = vunpack.c.0.s8 %v1423
        %v1425 = vlaneseq
        %v1426 = vshrl.u32 %v1425, 7
        %v1427 = vsub.s32 %v1424, %v1426
        %v1428 = vrot.slane %v1420, %v1427
        %v1430 = vunpack.c.l.s4 1934713408
        %v1431 = vunpack.c.0.s8 %v1430
        %v1432 = vlaneseq
        %v1433 = vshrl.u32 %v1432, 7
        %v1434 = vsub.s32 %v1431, %v1433
        %v1435 = vrot.slane %v1421, %v1434
        %v1436 = vcombine.low %v1403, %v1419
        %v1437 = vcombine.high %v1403, %v1419
        %v1439 = vunpack.c.l.s4 1934713408
        %v1440 = vunpack.c.0.s8 %v1439
        %v1441 = vlaneseq
        %v1442 = vshrl.u32 %v1441, 7
        %v1443 = vsub.s32 %v1440, %v1442
        %v1444 = vrot.slane %v1436, %v1443
        %v1446 = vunpack.c.l.s4 1934713408
        %v1447 = vunpack.c.0.s8 %v1446
        %v1448 = vlaneseq
        %v1449 = vshrl.u32 %v1448, 7
        %v1450 = vsub.s32 %v1447, %v1449
        %v1451 = vrot.slane %v1437, %v1450
        %v1452 = vcombine.high %v1428, 0.0
        %v1453 = vcombine.high %v1435, 0.0
        %v1454 = vcombine.high %v1444, 0.0
        %v1455 = vcombine.high %v1451, 0.0
        %1457 = vrot.lane.b32.xlu0 %v1384, 32
        %v1458 = vpop.permute.xlu0 %1457
        %1461 = vrot.lane.b32.xlu0 %v1367, 64
        %v1462 = vpop.permute.xlu0 %1461
        %1465 = vrot.lane.b32.xlu0 %v1385, 96
        %v1466 = vpop.permute.xlu0 %1465
        %1469 = vrot.lane.b32.xlu0 %v1386, 32
        %v1470 = vpop.permute.xlu0 %1469
        %1473 = vrot.lane.b32.xlu0 %v1383, 64
        %v1474 = vpop.permute.xlu0 %1473
        %1477 = vrot.lane.b32.xlu0 %v1387, 96
        %v1478 = vpop.permute.xlu0 %1477
        %1481 = vrot.lane.b32.xlu0 %v1452, 32
        %v1482 = vpop.permute.xlu0 %1481
        %1485 = vrot.lane.b32.xlu0 %v1435, 64
        %v1486 = vpop.permute.xlu0 %1485
        %1489 = vrot.lane.b32.xlu0 %v1453, 96
        %v1490 = vpop.permute.xlu0 %1489
        %1493 = vrot.lane.b32.xlu0 %v1454, 32
        %v1494 = vpop.permute.xlu0 %1493
        %1497 = vrot.lane.b32.xlu0 %v1451, 64
        %v1498 = vpop.permute.xlu0 %1497
        %1501 = vrot.lane.b32.xlu0 %v1455, 96
        %v1502 = vpop.permute.xlu0 %1501
        %v1504 = vsel %vm334, %v1360, %v1458
        %v1505 = vsel %vm976, %v1504, %v1462
        %v1506 = vsel %vm980, %v1505, %v1466
        %v1507 = vsel %vm334, %v1376, %v1470
        %v1508 = vsel %vm976, %v1507, %v1474
        %v1509 = vsel %vm980, %v1508, %v1478
        %v1510 = vsel %vm334, %v1428, %v1482
        %v1511 = vsel %vm976, %v1510, %v1486
        %v1512 = vsel %vm980, %v1511, %v1490
        %v1513 = vsel %vm334, %v1444, %v1494
        %v1514 = vsel %vm976, %v1513, %v1498
        %v1515 = vsel %vm980, %v1514, %v1502
        %v1520 = vcombine.low %v1506, %v1509
        %v1521 = vcombine.low %v1512, %v1515
        %1524 = vst [vmem:[%s299] sm:$0xff] %v1520
        %1525 = vst [vmem:[%s299 + $0x8] sm:$0xff] %v1521
        %s1526 = sand.u32 %s114, 1
        %s1527 = scalar_lea.sflag [#allocation4], %s1526
        %s1528 = sand.u32 %s114, 1
        %s1529 = smul.addr %s1528, 16
        %s1530 = scalar_lea.vmem [#allocation8], %s1529
        %s1531 = sand.u32 %s140, 1
        %s1532 = scalar_lea.sflag [#allocation10], %s1531
        %s1533 = sand.u32 %s140, 1
        %s1534 = smul.addr %s1533, 8
        %s1535 = scalar_lea.vmem [#allocation9], %s1534
        // Predicated region
        $region45: #{tpu_custom_call.1} parent=31 // pred_check
          %p1536 = pneg %p124
        $region46: #{tpu_custom_call.1} parent=31 // pred_check_branch
          %1538 = sbr.rel (%p1536) target = $region48
        $region47: #{tpu_custom_call.1} parent=31 // pred_region
          %s1540 = ssub.s32 256, 256
          %1541 = vsyncadd %s1527, %s1540
          %s1542 = smul.addr %s28, 4
          %s1543 = smul.addr %s1542, 64
          %s1544 = scalar_lea.hbm %s3, %s1543
          %s1546 = sshll.u32 %s1530, 4
          %s1547 = int_to_ptr.vmem [resolvable:$true] %s1546
          %1549 = dma.vmem_to_hbm [thread:$0]  %s1547, 256, %s1544, %s1527
        $region48: #{tpu_custom_call.1} parent=31 // pred_fallthru
          _
        // Predicated region
        $region49: #{tpu_custom_call.1} parent=31 // pred_check
          %p1550 = pneg %p150
        $region50: #{tpu_custom_call.1} parent=31 // pred_check_branch
          %1552 = sbr.rel (%p1550) target = $region52
        $region51: #{tpu_custom_call.1} parent=31 // pred_region
          %s1554 = ssub.s32 128, 128
          %1555 = vsyncadd %s1532, %s1554
          %s1556 = smul.addr %s28, 2
          %s1557 = smul.addr %s1556, 64
          %s1558 = scalar_lea.hbm %s4, %s1557
          %s1560 = sshll.u32 %s1535, 4
          %s1561 = int_to_ptr.vmem [resolvable:$true] %s1560
          %1563 = dma.vmem_to_hbm [thread:$0]  %s1561, 128, %s1558, %s1532
        $region52: #{tpu_custom_call.1} parent=31 // pred_fallthru
          _
      $region32: #{tpu_custom_call.1} parent=5 // pred_fallthru
        _
      %p1564 = scmp.le.s32.totalorder 2, %s23
      // Predicated region
      $region53: #{tpu_custom_call.1} parent=5 // pred_check
        %p1565 = pneg %p1564
      $region54: #{tpu_custom_call.1} parent=5 // pred_check_branch
        %1567 = sbr.rel (%p1565) target = $region56
      $region55: #{tpu_custom_call.1} parent=5 // pred_region
        %s1568 = ssub.s32 %s23, 2
        // Predicated region
        $region57: #{tpu_custom_call.1} parent=55 // pred_check
          %p1569 = pneg %p130
        $region58: #{tpu_custom_call.1} parent=55 // pred_check_branch
          %1571 = sbr.rel (%p1569) target = $region60
        $region59: #{tpu_custom_call.1} parent=55 // pred_region
          %s1572 = sand.u32 %s115, 1
          %s1573 = scalar_lea.sflag [#allocation4], %s1572
          %s1574 = sand.u32 %s115, 1
          %s1575 = smul.addr %s1574, 16
          %s1576 = scalar_lea.vmem [#allocation8], %s1575
          %1577 = dma.done %s1573, 256
        $region60: #{tpu_custom_call.1} parent=55 // pred_fallthru
          _
        // Predicated region
        $region61: #{tpu_custom_call.1} parent=55 // pred_check
          %p1578 = pneg %p156
        $region62: #{tpu_custom_call.1} parent=55 // pred_check_branch
          %1580 = sbr.rel (%p1578) target = $region64
        $region63: #{tpu_custom_call.1} parent=55 // pred_region
          %s1581 = sand.u32 %s141, 1
          %s1582 = scalar_lea.sflag [#allocation10], %s1581
          %s1583 = sand.u32 %s141, 1
          %s1584 = smul.addr %s1583, 8
          %s1585 = scalar_lea.vmem [#allocation9], %s1584
          %1586 = dma.done %s1582, 128
        $region64: #{tpu_custom_call.1} parent=55 // pred_fallthru
          _
      $region56: #{tpu_custom_call.1} parent=5 // pred_fallthru
        _
    $region6: #{tpu_custom_call.1} parent=1 // loop_footer
      %s27 = sadd.s32 1, %s23
    $region7: #{tpu_custom_call.1} parent=1 // loop_footer_branch
      %22 = sbr.rel target = $region3
    $region8: #{tpu_custom_call.1} parent=1 // loop_exit
      _
    %1587 = vsyncpa [#allocation3], 1
    %s1588 = scalar_lea.sflag [#allocation3], 1
    %1589 = vsyncpa %s1588, 1
    %1590 = vsyncpa [#allocation6], 1
    %s1591 = scalar_lea.sflag [#allocation6], 1
    %1592 = vsyncpa %s1591, 1
    %1593 = vsyncpa [#allocation4], 1
    %s1594 = scalar_lea.sflag [#allocation4], 1
    %1595 = vsyncpa %s1594, 1
    %1596 = vsyncpa [#allocation10], 1
    %s1597 = scalar_lea.sflag [#allocation10], 1
    %1598 = vsyncpa %s1597, 1

</llo_original>
